<compile_context>
chip_gen: v5e
topology: v5e:2x2
jax: 0.10.0
libtpu: 0.0.40
codegen_flags: <defaults>
</compile_context>

<pallas_src>
import functools
import math

import jax
import jax.numpy as jnp
from jax.experimental import pallas as pl
from jax.experimental.pallas import tpu as pltpu


def clip_layer_kernel(x_ref,
                      ln1_g_ref, ln1_b_ref,          # (1, E)  f32
                      wqkv_ref, bqkv_ref,            # (E, 3E) bf16, (1, 3E) f32 (q part pre-scaled)
                      wo_ref, bo_ref,                # (E, E)  bf16, (1, E)  f32
                      ln2_g_ref, ln2_b_ref,          # (1, E)  f32
                      w1_ref, b1_ref,                # (E, 4E) bf16, (1, 4E) f32
                      w2_ref, b2_ref,                # (4E, E) bf16, (1, E)  f32
                      o_ref,
                      qkv_ref,                       # VMEM scratch (M, 3E) bf16
                      attn_ref,                      # VMEM scratch (M, E)  bf16
                      *, n_head: int, bt: int, s_pad: int, mlp_chunk: int):
    eps = 1e-5
    E = x_ref.shape[-1]
    d_head = E // n_head
    M = bt * s_pad

    # (Bt, S_pad, E) -> (Bt*S_pad, E); layout-free because s_pad % 8 == 0.
    x = x_ref[...].astype(jnp.float32).reshape(M, E)

    # ---- LayerNorm 1 (f32) ----
    mu = jnp.mean(x, axis=-1, keepdims=True)
    var = jnp.mean((x - mu) ** 2, axis=-1, keepdims=True)
    xn = (x - mu) * jax.lax.rsqrt(var + eps)
    xn = xn * ln1_g_ref[...] + ln1_b_ref[...]
    xn_b = xn.astype(jnp.bfloat16)

    # ---- Fused QKV projection: one full-width (M,E)@(E,3E) matmul ----
    # 1/sqrt(d_head) is already folded into the q columns of wqkv / bqkv.
    qkv = jnp.dot(xn_b, wqkv_ref[...], preferred_element_type=jnp.float32) + bqkv_ref[...]
    qkv_ref[...] = qkv.astype(jnp.bfloat16)

    # Causal mask, shared across samples/heads. The diagonal is always unmasked, so the
    # row-max stays finite and max-subtraction cannot produce NaN. Padded key columns
    # (col >= real S) are strictly "future" for every real query row -> masked for free.
    row = jax.lax.broadcasted_iota(jnp.int32, (s_pad, s_pad), 0)
    col = jax.lax.broadcasted_iota(jnp.int32, (s_pad, s_pad), 1)
    causal = col > row

    nt_dims = (((1,), (1,)), ((), ()))               # contract d_head(q) with d_head(k)
    hg = 2 if (n_head % 2 == 0) else 1               # 2 heads / store -> 128-lane slabs at d_head=64

    # ---- Causal self-attention (per sample, per head-pair) ----
    for b in range(bt):
        r0 = b * s_pad
        for h0 in range(0, n_head, hg):
            outs = []
            for h in range(h0, h0 + hg):
                q = qkv_ref[r0:r0 + s_pad, h * d_head:(h + 1) * d_head]
                k = qkv_ref[r0:r0 + s_pad, E + h * d_head:E + (h + 1) * d_head]
                v = qkv_ref[r0:r0 + s_pad, 2 * E + h * d_head:2 * E + (h + 1) * d_head]

                s = jax.lax.dot_general(q, k, nt_dims,
                                        preferred_element_type=jnp.float32)   # (S_pad, S_pad)
                s = jnp.where(causal, -jnp.inf, s)
                s = s - jnp.max(s, axis=-1, keepdims=True)
                p = jnp.exp(s)
                p = p * pl.reciprocal(jnp.sum(p, axis=-1, keepdims=True), approx=True)
                outs.append(jnp.dot(p.astype(jnp.bfloat16), v,
                                    preferred_element_type=jnp.float32))
            blk = outs[0] if hg == 1 else jnp.concatenate(outs, axis=-1)
            attn_ref[r0:r0 + s_pad, h0 * d_head:(h0 + hg) * d_head] = blk.astype(jnp.bfloat16)

    # ---- Out projection + residual 1 ----
    y = jnp.dot(attn_ref[...], wo_ref[...], preferred_element_type=jnp.float32) + bo_ref[...]
    y = y + x

    # ---- LayerNorm 2 (f32) ----
    mu2 = jnp.mean(y, axis=-1, keepdims=True)
    var2 = jnp.mean((y - mu2) ** 2, axis=-1, keepdims=True)
    yn = (y - mu2) * jax.lax.rsqrt(var2 + eps)
    yn = yn * ln2_g_ref[...] + ln2_b_ref[...]
    yn_b = yn.astype(jnp.bfloat16)

    # ---- MLP with QuickGELU, tiled over the 4E hidden axis ----
    H4 = 4 * E
    acc = jnp.zeros((M, E), jnp.float32)
    for c0 in range(0, H4, mlp_chunk):
        c1 = min(c0 + mlp_chunk, H4)
        h1 = jnp.dot(yn_b, w1_ref[:, c0:c1],
                     preferred_element_type=jnp.float32) + b1_ref[:, c0:c1]
        h1 = h1 * jax.nn.sigmoid(1.702 * h1)         # QuickGELU (f32, EUP)
        acc = acc + jnp.dot(h1.astype(jnp.bfloat16), w2_ref[c0:c1, :],
                            preferred_element_type=jnp.float32)

    out = acc + b2_ref[...] + y                       # residual 2
    o_ref[...] = out.reshape(bt, s_pad, E).astype(o_ref.dtype)


def clip_layer(x, params, n_head, *, mlp_chunk=512):
    B, S, E = x.shape
    (ln1_g, ln1_b, wqkv, bqkv, wo, bo, ln2_g, ln2_b, w1, b1, w2, b2) = params
    d_head = E // n_head
    scale = 1.0 / math.sqrt(d_head)
    wdt = jnp.bfloat16
    f32 = jnp.float32
    H4 = 4 * E

    # Pad S up to a sublane multiple so the (Bt,S,E)->(Bt*S,E) flatten is layout-free;
    # padded keys are masked by the causal mask, padded rows are sliced off below.
    s_pad = ((S + 7) // 8) * 8
    # Batch tile: target ~256 matmul rows per step, but keep >=2 grid steps when B >= 2
    # so v7x's two TensorCores (and v5e/v6e pipelining) stay busy.
    bt = max(1, min(max(1, 256 // s_pad), B))
    if B >= 2:
        bt = min(bt, max(1, B // 2))
    b_pad = ((B + bt - 1) // bt) * bt
    M = bt * s_pad

    x_p = x
    if s_pad != S or b_pad != B:
        x_p = jnp.pad(x, ((0, b_pad - B), (0, s_pad - S), (0, 0)))

    # PyTorch Linear stores W as (out, in) and computes x @ W.T + b.
    # Fold 1/sqrt(d_head) into Wq / bq (trace-time constant fold, zero runtime cost).
    wqkv_t = wqkv.T.astype(f32)                      # (E, 3E): [q | k | v] columns
    wqkv_t = wqkv_t.at[:, :E].multiply(scale)
    bqkv_s = bqkv.astype(f32).at[:E].multiply(scale)

    mlp_chunk = min(mlp_chunk, H4)

    args = (
        x_p,
        ln1_g.reshape(1, E).astype(f32), ln1_b.reshape(1, E).astype(f32),
        wqkv_t.astype(wdt), bqkv_s.reshape(1, 3 * E),
        wo.T.astype(wdt), bo.reshape(1, E).astype(f32),
        ln2_g.reshape(1, E).astype(f32), ln2_b.reshape(1, E).astype(f32),
        w1.T.astype(wdt), b1.reshape(1, H4).astype(f32),
        w2.T.astype(wdt), b2.reshape(1, E).astype(f32),
    )

    # Generation-aware VMEM budget: ~85% of physical (v7x 64 MiB -> ~54 MiB,
    # v5e/v6e 128 MiB -> ~108 MiB), capped so we leave room for compiler temps.
    try:
        vmem_cap = int(pltpu.get_tpu_info().vmem_capacity_bytes)
    except Exception:
        vmem_cap = 64 * 1024 * 1024
    vmem_limit = min(int(vmem_cap * 0.85), 112 * 1024 * 1024)

    kernel = functools.partial(clip_layer_kernel, n_head=n_head, bt=bt,
                               s_pad=s_pad, mlp_chunk=mlp_chunk)

    def build(single_buffer_weights):
        def const_spec(a):
            idx = lambda i, _r=a.ndim: (0,) * _r      # constant block index -> never re-DMA'd
            if single_buffer_weights:
                # Weights never change across grid steps -> no need for double buffering;
                # halves resident weight VMEM (critical for CLIP-L on v7x's 64 MiB).
                return pl.BlockSpec(a.shape, idx, pipeline_mode=pl.Buffered(1))
            return pl.BlockSpec(a.shape, idx)

        in_specs = [pl.BlockSpec((bt, s_pad, E), lambda i: (i, 0, 0))] + \
                   [const_spec(a) for a in args[1:]]

        return pl.pallas_call(
            kernel,
            out_shape=jax.ShapeDtypeStruct((b_pad, s_pad, E), x.dtype),
            grid=(b_pad // bt,),
            in_specs=in_specs,
            out_specs=pl.BlockSpec((bt, s_pad, E), lambda i: (i, 0, 0)),
            scratch_shapes=[pltpu.VMEM((M, 3 * E), jnp.bfloat16),   # fused QKV
                            pltpu.VMEM((M, E), jnp.bfloat16)],      # per-head attention outputs
            compiler_params=pltpu.CompilerParams(
                dimension_semantics=("parallel",),
                vmem_limit_bytes=vmem_limit,
            ),
        )

    try:
        out = jax.block_until_ready(build(True)(*args))
    except Exception:
        # Fallback: default (double-buffered) weight pipelining if Buffered(1) lowering
        # is unavailable in this JAX build.
        out = jax.block_until_ready(build(False)(*args))

    return out[:B, :S, :]


def clip_layer_ref(x, params, n_head):
    """Pure-JAX f32 reference matching the PyTorch forward."""
    (ln1_g, ln1_b, wqkv, bqkv, wo, bo, ln2_g, ln2_b, w1, b1, w2, b2) = params
    B, S, E = x.shape
    d_head = E // n_head

    def ln(v, g, b):
        mu = v.mean(-1, keepdims=True)
        var = ((v - mu) ** 2).mean(-1, keepdims=True)
        return (v - mu) / jnp.sqrt(var + 1e-5) * g + b

    residue = x
    h = ln(x, ln1_g, ln1_b)
    qkv = h @ wqkv.T + bqkv
    q, k, v = jnp.split(qkv, 3, axis=-1)
    q = q.reshape(B, S, n_head, d_head).transpose(0, 2, 1, 3)
    k = k.reshape(B, S, n_head, d_head).transpose(0, 2, 1, 3)
    v = v.reshape(B, S, n_head, d_head).transpose(0, 2, 1, 3)
    w = jnp.einsum("bhqd,bhkd->bhqk", q, k)
    mask = jnp.triu(jnp.ones((S, S), bool), 1)
    w = jnp.where(mask, -jnp.inf, w) / math.sqrt(d_head)
    w = jax.nn.softmax(w, axis=-1)
    o = jnp.einsum("bhqk,bhkd->bhqd", w, v).transpose(0, 2, 1, 3).reshape(B, S, E)
    h = o @ wo.T + bo
    h = h + residue
    residue = h
    g = ln(h, ln2_g, ln2_b)
    g = g @ w1.T + b1
    g = g * jax.nn.sigmoid(1.702 * g)
    g = g @ w2.T + b2
    return g + residue


if __name__ == "__main__":
    B, S, E, H = 2, 8, 32, 4

    key = jax.random.PRNGKey(0)
    ks = jax.random.split(key, 16)

    params = (
        1.0 + 0.1 * jax.random.normal(ks[0], (E,), jnp.float32),      # ln1 gamma
        0.1 * jax.random.normal(ks[1], (E,), jnp.float32),            # ln1 beta
        0.05 * jax.random.normal(ks[2], (3 * E, E), jnp.float32),     # in_proj W
        0.05 * jax.random.normal(ks[3], (3 * E,), jnp.float32),       # in_proj b
        0.05 * jax.random.normal(ks[4], (E, E), jnp.float32),         # out_proj W
        0.05 * jax.random.normal(ks[5], (E,), jnp.float32),           # out_proj b
        1.0 + 0.1 * jax.random.normal(ks[6], (E,), jnp.float32),      # ln2 gamma
        0.1 * jax.random.normal(ks[7], (E,), jnp.float32),            # ln2 beta
        0.05 * jax.random.normal(ks[8], (4 * E, E), jnp.float32),     # linear_1 W
        0.05 * jax.random.normal(ks[9], (4 * E,), jnp.float32),       # linear_1 b
        0.05 * jax.random.normal(ks[10], (E, 4 * E), jnp.float32),    # linear_2 W
        0.05 * jax.random.normal(ks[11], (E,), jnp.float32),          # linear_2 b
    )
    x = jax.random.normal(ks[12], (B, S, E), jnp.float32)

    out = clip_layer(x, params, H)
    out = jax.block_until_ready(out)

    ref = clip_layer_ref(x, params, H)
    assert out.shape == (B, S, E)
    # bf16 matmul operands + approx reciprocal -> loosened tolerance (accumulation stays f32).
    assert jnp.allclose(out, ref, rtol=2e-2, atol=2e-2), \
        f"max abs err {jnp.max(jnp.abs(out - ref))}"

    print("KERNEL_OK")
</pallas_src>

<mosaic_0001>
module attributes {stable_mosaic.version = 11 : i64} {
  func.func @clip_layer_kernel(%arg0: i32, %arg1: memref<1x8x32xf32, #tpu.memory_space<vmem>>, %arg2: memref<1x32xf32, #tpu.memory_space<vmem>>, %arg3: memref<1x32xf32, #tpu.memory_space<vmem>>, %arg4: memref<32x96xbf16, #tpu.memory_space<vmem>>, %arg5: memref<1x96xf32, #tpu.memory_space<vmem>>, %arg6: memref<32x32xbf16, #tpu.memory_space<vmem>>, %arg7: memref<1x32xf32, #tpu.memory_space<vmem>>, %arg8: memref<1x32xf32, #tpu.memory_space<vmem>>, %arg9: memref<1x32xf32, #tpu.memory_space<vmem>>, %arg10: memref<32x128xbf16, #tpu.memory_space<vmem>>, %arg11: memref<1x128xf32, #tpu.memory_space<vmem>>, %arg12: memref<128x32xbf16, #tpu.memory_space<vmem>>, %arg13: memref<1x32xf32, #tpu.memory_space<vmem>>, %arg14: memref<1x8x32xf32, #tpu.memory_space<vmem>>, %arg15: memref<8x96xbf16, #tpu.memory_space<vmem>>, %arg16: memref<8x32xbf16, #tpu.memory_space<vmem>>) attributes {dimension_semantics = [#tpu.dimension_semantics<parallel>], iteration_bounds = array<i64: 2>, scalar_prefetch = 0 : i64, scratch_operands = 2 : i64, tpu.core_type = #tpu.core_type<tc>, window_params = [{transform_indices = @transform_0, window_bounds = array<i64: 1, 8, 32>}, {pipeline_mode = #tpu.pipeline_mode<synchronous>, transform_indices = @transform_1, window_bounds = array<i64: 1, 32>}, {pipeline_mode = #tpu.pipeline_mode<synchronous>, transform_indices = @transform_2, window_bounds = array<i64: 1, 32>}, {pipeline_mode = #tpu.pipeline_mode<synchronous>, transform_indices = @transform_3, window_bounds = array<i64: 32, 96>}, {pipeline_mode = #tpu.pipeline_mode<synchronous>, transform_indices = @transform_4, window_bounds = array<i64: 1, 96>}, {pipeline_mode = #tpu.pipeline_mode<synchronous>, transform_indices = @transform_5, window_bounds = array<i64: 32, 32>}, {pipeline_mode = #tpu.pipeline_mode<synchronous>, transform_indices = @transform_6, window_bounds = array<i64: 1, 32>}, {pipeline_mode = #tpu.pipeline_mode<synchronous>, transform_indices = @transform_7, window_bounds = array<i64: 1, 32>}, {pipeline_mode = #tpu.pipeline_mode<synchronous>, transform_indices = @transform_8, window_bounds = array<i64: 1, 32>}, {pipeline_mode = #tpu.pipeline_mode<synchronous>, transform_indices = @transform_9, window_bounds = array<i64: 32, 128>}, {pipeline_mode = #tpu.pipeline_mode<synchronous>, transform_indices = @transform_10, window_bounds = array<i64: 1, 128>}, {pipeline_mode = #tpu.pipeline_mode<synchronous>, transform_indices = @transform_11, window_bounds = array<i64: 128, 32>}, {pipeline_mode = #tpu.pipeline_mode<synchronous>, transform_indices = @transform_12, window_bounds = array<i64: 1, 32>}, {transform_indices = @transform_13, window_bounds = array<i64: 1, 8, 32>}]} {
    %c0 = arith.constant 0 : index
    %c0_0 = arith.constant 0 : index
    %c0_1 = arith.constant 0 : index
    %0 = vector.load %arg1[%c0, %c0_0, %c0_1] : memref<1x8x32xf32, #tpu.memory_space<vmem>>, vector<1x8x32xf32>
    %1 = vector.shape_cast %0 : vector<1x8x32xf32> to vector<8x32xf32>
    %cst = arith.constant dense<0.000000e+00> : vector<8xf32>
    %2 = vector.multi_reduction <add>, %1, %cst [1] : vector<8x32xf32> to vector<8xf32>
    %3 = vector.shape_cast %2 : vector<8xf32> to vector<8x1xf32>
    %cst_2 = arith.constant 3.200000e+01 : f32
    %4 = vector.broadcast %cst_2 : f32 to vector<8x1xf32>
    %5 = arith.divf %3, %4 : vector<8x1xf32>
    %6 = vector.broadcast %5 : vector<8x1xf32> to vector<8x32xf32>
    %7 = arith.subf %1, %6 : vector<8x32xf32>
    %8 = arith.mulf %7, %7 : vector<8x32xf32>
    %cst_3 = arith.constant dense<0.000000e+00> : vector<8xf32>
    %9 = vector.multi_reduction <add>, %8, %cst_3 [1] : vector<8x32xf32> to vector<8xf32>
    %10 = vector.shape_cast %9 : vector<8xf32> to vector<8x1xf32>
    %cst_4 = arith.constant 3.200000e+01 : f32
    %11 = vector.broadcast %cst_4 : f32 to vector<8x1xf32>
    %12 = arith.divf %10, %11 : vector<8x1xf32>
    %13 = vector.broadcast %5 : vector<8x1xf32> to vector<8x32xf32>
    %14 = arith.subf %1, %13 : vector<8x32xf32>
    %cst_5 = arith.constant 9.99999974E-6 : f32
    %15 = vector.broadcast %cst_5 : f32 to vector<8x1xf32>
    %16 = arith.addf %12, %15 : vector<8x1xf32>
    %17 = math.rsqrt %16 : vector<8x1xf32>
    %18 = vector.broadcast %17 : vector<8x1xf32> to vector<8x32xf32>
    %19 = arith.mulf %14, %18 : vector<8x32xf32>
    %c0_6 = arith.constant 0 : index
    %c0_7 = arith.constant 0 : index
    %20 = vector.load %arg2[%c0_6, %c0_7] : memref<1x32xf32, #tpu.memory_space<vmem>>, vector<1x32xf32>
    %21 = vector.broadcast %20 : vector<1x32xf32> to vector<8x32xf32>
    %22 = arith.mulf %19, %21 : vector<8x32xf32>
    %c0_8 = arith.constant 0 : index
    %c0_9 = arith.constant 0 : index
    %23 = vector.load %arg3[%c0_8, %c0_9] : memref<1x32xf32, #tpu.memory_space<vmem>>, vector<1x32xf32>
    %24 = vector.broadcast %23 : vector<1x32xf32> to vector<8x32xf32>
    %25 = arith.addf %22, %24 : vector<8x32xf32>
    %26 = arith.truncf %25 : vector<8x32xf32> to vector<8x32xbf16>
    %c0_10 = arith.constant 0 : index
    %c0_11 = arith.constant 0 : index
    %27 = vector.load %arg4[%c0_10, %c0_11] : memref<32x96xbf16, #tpu.memory_space<vmem>>, vector<32x96xbf16>
    %cst_12 = arith.constant dense<0.000000e+00> : vector<8x96xf32>
    %28 = tpu.matmul %26, %27, %cst_12 {dimension_numbers = #tpu.dot_dimension_numbers<[1], [0], [0], [1], [0, 0, 1, 1], [], []>} : vector<8x32xbf16>, vector<32x96xbf16>, vector<8x96xf32> -> vector<8x96xf32>
    %c0_13 = arith.constant 0 : index
    %c0_14 = arith.constant 0 : index
    %29 = vector.load %arg5[%c0_13, %c0_14] : memref<1x96xf32, #tpu.memory_space<vmem>>, vector<1x96xf32>
    %30 = vector.broadcast %29 : vector<1x96xf32> to vector<8x96xf32>
    %31 = arith.addf %28, %30 : vector<8x96xf32>
    %32 = arith.truncf %31 : vector<8x96xf32> to vector<8x96xbf16>
    %c0_15 = arith.constant 0 : index
    %c0_16 = arith.constant 0 : index
    %33 = vector.load %arg15[%c0_15, %c0_16] : memref<8x96xbf16, #tpu.memory_space<vmem>>, vector<8x96xbf16>
    tpu.vector_store %arg15[%c0_15, %c0_16], %32 {strides = array<i32>} : memref<8x96xbf16, #tpu.memory_space<vmem>>, vector<8x96xbf16>,
    %34 = tpu.iota {dimensions = array<i32: 0>} : vector<8x8xi32>
    %35 = tpu.iota {dimensions = array<i32: 1>} : vector<8x8xi32>
    %36 = arith.cmpi sgt, %35, %34 : vector<8x8xi32>
    %c0_17 = arith.constant 0 : index
    %c0_18 = arith.constant 0 : index
    %37 = vector.load %arg15[%c0_17, %c0_18] : memref<8x96xbf16, #tpu.memory_space<vmem>>, vector<8x8xbf16>
    %c0_19 = arith.constant 0 : index
    %c32 = arith.constant 32 : index
    %38 = vector.load %arg15[%c0_19, %c32] : memref<8x96xbf16, #tpu.memory_space<vmem>>, vector<8x8xbf16>
    %c0_20 = arith.constant 0 : index
    %c64 = arith.constant 64 : index
    %39 = vector.load %arg15[%c0_20, %c64] : memref<8x96xbf16, #tpu.memory_space<vmem>>, vector<8x8xbf16>
    %cst_21 = arith.constant dense<0.000000e+00> : vector<8x8xf32>
    %40 = tpu.matmul %37, %38, %cst_21 {dimension_numbers = #tpu.dot_dimension_numbers<[1], [1], [0], [0], [0, 0, 1, 0], [], []>} : vector<8x8xbf16>, vector<8x8xbf16>, vector<8x8xf32> -> vector<8x8xf32>
    %cst_22 = arith.constant 0xFF800000 : f32
    %41 = vector.broadcast %cst_22 : f32 to vector<8x8xf32>
    %42 = arith.select %36, %41, %40 : vector<8x8xi1>, vector<8x8xf32>
    %cst_23 = arith.constant dense<0xFF800000> : vector<8xf32>
    %43 = vector.multi_reduction <maximumf>, %42, %cst_23 [1] : vector<8x8xf32> to vector<8xf32>
    %44 = vector.shape_cast %43 : vector<8xf32> to vector<8x1xf32>
    %45 = vector.broadcast %44 : vector<8x1xf32> to vector<8x8xf32>
    %46 = arith.subf %42, %45 : vector<8x8xf32>
    %47 = math.exp %46 : vector<8x8xf32>
    %cst_24 = arith.constant dense<0.000000e+00> : vector<8xf32>
    %48 = vector.multi_reduction <add>, %47, %cst_24 [1] : vector<8x8xf32> to vector<8xf32>
    %49 = vector.shape_cast %48 : vector<8xf32> to vector<8x1xf32>
    %50 = tpu.reciprocal %49 {approx = true} : vector<8x1xf32> -> vector<8x1xf32>
    %51 = vector.broadcast %50 : vector<8x1xf32> to vector<8x8xf32>
    %52 = arith.mulf %47, %51 : vector<8x8xf32>
    %53 = arith.truncf %52 : vector<8x8xf32> to vector<8x8xbf16>
    %cst_25 = arith.constant dense<0.000000e+00> : vector<8x8xf32>
    %54 = tpu.matmul %53, %39, %cst_25 {dimension_numbers = #tpu.dot_dimension_numbers<[1], [0], [0], [1], [0, 0, 1, 1], [], []>} : vector<8x8xbf16>, vector<8x8xbf16>, vector<8x8xf32> -> vector<8x8xf32>
    %c0_26 = arith.constant 0 : index
    %c8 = arith.constant 8 : index
    %55 = vector.load %arg15[%c0_26, %c8] : memref<8x96xbf16, #tpu.memory_space<vmem>>, vector<8x8xbf16>
    %c0_27 = arith.constant 0 : index
    %c40 = arith.constant 40 : index
    %56 = vector.load %arg15[%c0_27, %c40] : memref<8x96xbf16, #tpu.memory_space<vmem>>, vector<8x8xbf16>
    %c0_28 = arith.constant 0 : index
    %c72 = arith.constant 72 : index
    %57 = vector.load %arg15[%c0_28, %c72] : memref<8x96xbf16, #tpu.memory_space<vmem>>, vector<8x8xbf16>
    %cst_29 = arith.constant dense<0.000000e+00> : vector<8x8xf32>
    %58 = tpu.matmul %55, %56, %cst_29 {dimension_numbers = #tpu.dot_dimension_numbers<[1], [1], [0], [0], [0, 0, 1, 0], [], []>} : vector<8x8xbf16>, vector<8x8xbf16>, vector<8x8xf32> -> vector<8x8xf32>
    %cst_30 = arith.constant 0xFF800000 : f32
    %59 = vector.broadcast %cst_30 : f32 to vector<8x8xf32>
    %60 = arith.select %36, %59, %58 : vector<8x8xi1>, vector<8x8xf32>
    %cst_31 = arith.constant dense<0xFF800000> : vector<8xf32>
    %61 = vector.multi_reduction <maximumf>, %60, %cst_31 [1] : vector<8x8xf32> to vector<8xf32>
    %62 = vector.shape_cast %61 : vector<8xf32> to vector<8x1xf32>
    %63 = vector.broadcast %62 : vector<8x1xf32> to vector<8x8xf32>
    %64 = arith.subf %60, %63 : vector<8x8xf32>
    %65 = math.exp %64 : vector<8x8xf32>
    %cst_32 = arith.constant dense<0.000000e+00> : vector<8xf32>
    %66 = vector.multi_reduction <add>, %65, %cst_32 [1] : vector<8x8xf32> to vector<8xf32>
    %67 = vector.shape_cast %66 : vector<8xf32> to vector<8x1xf32>
    %68 = tpu.reciprocal %67 {approx = true} : vector<8x1xf32> -> vector<8x1xf32>
    %69 = vector.broadcast %68 : vector<8x1xf32> to vector<8x8xf32>
    %70 = arith.mulf %65, %69 : vector<8x8xf32>
    %71 = arith.truncf %70 : vector<8x8xf32> to vector<8x8xbf16>
    %cst_33 = arith.constant dense<0.000000e+00> : vector<8x8xf32>
    %72 = tpu.matmul %71, %57, %cst_33 {dimension_numbers = #tpu.dot_dimension_numbers<[1], [0], [0], [1], [0, 0, 1, 1], [], []>} : vector<8x8xbf16>, vector<8x8xbf16>, vector<8x8xf32> -> vector<8x8xf32>
    %73 = tpu.concatenate %54, %72 in 1 : vector<8x8xf32>, vector<8x8xf32> -> vector<8x16xf32>
    %74 = arith.truncf %73 : vector<8x16xf32> to vector<8x16xbf16>
    %c0_34 = arith.constant 0 : index
    %c0_35 = arith.constant 0 : index
    %75 = vector.load %arg16[%c0_34, %c0_35] : memref<8x32xbf16, #tpu.memory_space<vmem>>, vector<8x16xbf16>
    tpu.vector_store %arg16[%c0_34, %c0_35], %74 {strides = array<i32>} : memref<8x32xbf16, #tpu.memory_space<vmem>>, vector<8x16xbf16>,
    %c0_36 = arith.constant 0 : index
    %c16 = arith.constant 16 : index
    %76 = vector.load %arg15[%c0_36, %c16] : memref<8x96xbf16, #tpu.memory_space<vmem>>, vector<8x8xbf16>
    %c0_37 = arith.constant 0 : index
    %c48 = arith.constant 48 : index
    %77 = vector.load %arg15[%c0_37, %c48] : memref<8x96xbf16, #tpu.memory_space<vmem>>, vector<8x8xbf16>
    %c0_38 = arith.constant 0 : index
    %c80 = arith.constant 80 : index
    %78 = vector.load %arg15[%c0_38, %c80] : memref<8x96xbf16, #tpu.memory_space<vmem>>, vector<8x8xbf16>
    %cst_39 = arith.constant dense<0.000000e+00> : vector<8x8xf32>
    %79 = tpu.matmul %76, %77, %cst_39 {dimension_numbers = #tpu.dot_dimension_numbers<[1], [1], [0], [0], [0, 0, 1, 0], [], []>} : vector<8x8xbf16>, vector<8x8xbf16>, vector<8x8xf32> -> vector<8x8xf32>
    %cst_40 = arith.constant 0xFF800000 : f32
    %80 = vector.broadcast %cst_40 : f32 to vector<8x8xf32>
    %81 = arith.select %36, %80, %79 : vector<8x8xi1>, vector<8x8xf32>
    %cst_41 = arith.constant dense<0xFF800000> : vector<8xf32>
    %82 = vector.multi_reduction <maximumf>, %81, %cst_41 [1] : vector<8x8xf32> to vector<8xf32>
    %83 = vector.shape_cast %82 : vector<8xf32> to vector<8x1xf32>
    %84 = vector.broadcast %83 : vector<8x1xf32> to vector<8x8xf32>
    %85 = arith.subf %81, %84 : vector<8x8xf32>
    %86 = math.exp %85 : vector<8x8xf32>
    %cst_42 = arith.constant dense<0.000000e+00> : vector<8xf32>
    %87 = vector.multi_reduction <add>, %86, %cst_42 [1] : vector<8x8xf32> to vector<8xf32>
    %88 = vector.shape_cast %87 : vector<8xf32> to vector<8x1xf32>
    %89 = tpu.reciprocal %88 {approx = true} : vector<8x1xf32> -> vector<8x1xf32>
    %90 = vector.broadcast %89 : vector<8x1xf32> to vector<8x8xf32>
    %91 = arith.mulf %86, %90 : vector<8x8xf32>
    %92 = arith.truncf %91 : vector<8x8xf32> to vector<8x8xbf16>
    %cst_43 = arith.constant dense<0.000000e+00> : vector<8x8xf32>
    %93 = tpu.matmul %92, %78, %cst_43 {dimension_numbers = #tpu.dot_dimension_numbers<[1], [0], [0], [1], [0, 0, 1, 1], [], []>} : vector<8x8xbf16>, vector<8x8xbf16>, vector<8x8xf32> -> vector<8x8xf32>
    %c0_44 = arith.constant 0 : index
    %c24 = arith.constant 24 : index
    %94 = vector.load %arg15[%c0_44, %c24] : memref<8x96xbf16, #tpu.memory_space<vmem>>, vector<8x8xbf16>
    %c0_45 = arith.constant 0 : index
    %c56 = arith.constant 56 : index
    %95 = vector.load %arg15[%c0_45, %c56] : memref<8x96xbf16, #tpu.memory_space<vmem>>, vector<8x8xbf16>
    %c0_46 = arith.constant 0 : index
    %c88 = arith.constant 88 : index
    %96 = vector.load %arg15[%c0_46, %c88] : memref<8x96xbf16, #tpu.memory_space<vmem>>, vector<8x8xbf16>
    %cst_47 = arith.constant dense<0.000000e+00> : vector<8x8xf32>
    %97 = tpu.matmul %94, %95, %cst_47 {dimension_numbers = #tpu.dot_dimension_numbers<[1], [1], [0], [0], [0, 0, 1, 0], [], []>} : vector<8x8xbf16>, vector<8x8xbf16>, vector<8x8xf32> -> vector<8x8xf32>
    %cst_48 = arith.constant 0xFF800000 : f32
    %98 = vector.broadcast %cst_48 : f32 to vector<8x8xf32>
    %99 = arith.select %36, %98, %97 : vector<8x8xi1>, vector<8x8xf32>
    %cst_49 = arith.constant dense<0xFF800000> : vector<8xf32>
    %100 = vector.multi_reduction <maximumf>, %99, %cst_49 [1] : vector<8x8xf32> to vector<8xf32>
    %101 = vector.shape_cast %100 : vector<8xf32> to vector<8x1xf32>
    %102 = vector.broadcast %101 : vector<8x1xf32> to vector<8x8xf32>
    %103 = arith.subf %99, %102 : vector<8x8xf32>
    %104 = math.exp %103 : vector<8x8xf32>
    %cst_50 = arith.constant dense<0.000000e+00> : vector<8xf32>
    %105 = vector.multi_reduction <add>, %104, %cst_50 [1] : vector<8x8xf32> to vector<8xf32>
    %106 = vector.shape_cast %105 : vector<8xf32> to vector<8x1xf32>
    %107 = tpu.reciprocal %106 {approx = true} : vector<8x1xf32> -> vector<8x1xf32>
    %108 = vector.broadcast %107 : vector<8x1xf32> to vector<8x8xf32>
    %109 = arith.mulf %104, %108 : vector<8x8xf32>
    %110 = arith.truncf %109 : vector<8x8xf32> to vector<8x8xbf16>
    %cst_51 = arith.constant dense<0.000000e+00> : vector<8x8xf32>
    %111 = tpu.matmul %110, %96, %cst_51 {dimension_numbers = #tpu.dot_dimension_numbers<[1], [0], [0], [1], [0, 0, 1, 1], [], []>} : vector<8x8xbf16>, vector<8x8xbf16>, vector<8x8xf32> -> vector<8x8xf32>
    %112 = tpu.concatenate %93, %111 in 1 : vector<8x8xf32>, vector<8x8xf32> -> vector<8x16xf32>
    %113 = arith.truncf %112 : vector<8x16xf32> to vector<8x16xbf16>
    %c0_52 = arith.constant 0 : index
    %c16_53 = arith.constant 16 : index
    %114 = vector.load %arg16[%c0_52, %c16_53] : memref<8x32xbf16, #tpu.memory_space<vmem>>, vector<8x16xbf16>
    tpu.vector_store %arg16[%c0_52, %c16_53], %113 {strides = array<i32>} : memref<8x32xbf16, #tpu.memory_space<vmem>>, vector<8x16xbf16>,
    %c0_54 = arith.constant 0 : index
    %c0_55 = arith.constant 0 : index
    %115 = vector.load %arg16[%c0_54, %c0_55] : memref<8x32xbf16, #tpu.memory_space<vmem>>, vector<8x32xbf16>
    %c0_56 = arith.constant 0 : index
    %c0_57 = arith.constant 0 : index
    %116 = vector.load %arg6[%c0_56, %c0_57] : memref<32x32xbf16, #tpu.memory_space<vmem>>, vector<32x32xbf16>
    %cst_58 = arith.constant dense<0.000000e+00> : vector<8x32xf32>
    %117 = tpu.matmul %115, %116, %cst_58 {dimension_numbers = #tpu.dot_dimension_numbers<[1], [0], [0], [1], [0, 0, 1, 1], [], []>} : vector<8x32xbf16>, vector<32x32xbf16>, vector<8x32xf32> -> vector<8x32xf32>
    %c0_59 = arith.constant 0 : index
    %c0_60 = arith.constant 0 : index
    %118 = vector.load %arg7[%c0_59, %c0_60] : memref<1x32xf32, #tpu.memory_space<vmem>>, vector<1x32xf32>
    %119 = vector.broadcast %118 : vector<1x32xf32> to vector<8x32xf32>
    %120 = arith.addf %117, %119 : vector<8x32xf32>
    %121 = arith.addf %120, %1 : vector<8x32xf32>
    %cst_61 = arith.constant dense<0.000000e+00> : vector<8xf32>
    %122 = vector.multi_reduction <add>, %121, %cst_61 [1] : vector<8x32xf32> to vector<8xf32>
    %123 = vector.shape_cast %122 : vector<8xf32> to vector<8x1xf32>
    %cst_62 = arith.constant 3.200000e+01 : f32
    %124 = vector.broadcast %cst_62 : f32 to vector<8x1xf32>
    %125 = arith.divf %123, %124 : vector<8x1xf32>
    %126 = vector.broadcast %125 : vector<8x1xf32> to vector<8x32xf32>
    %127 = arith.subf %121, %126 : vector<8x32xf32>
    %128 = arith.mulf %127, %127 : vector<8x32xf32>
    %cst_63 = arith.constant dense<0.000000e+00> : vector<8xf32>
    %129 = vector.multi_reduction <add>, %128, %cst_63 [1] : vector<8x32xf32> to vector<8xf32>
    %130 = vector.shape_cast %129 : vector<8xf32> to vector<8x1xf32>
    %cst_64 = arith.constant 3.200000e+01 : f32
    %131 = vector.broadcast %cst_64 : f32 to vector<8x1xf32>
    %132 = arith.divf %130, %131 : vector<8x1xf32>
    %133 = vector.broadcast %125 : vector<8x1xf32> to vector<8x32xf32>
    %134 = arith.subf %121, %133 : vector<8x32xf32>
    %cst_65 = arith.constant 9.99999974E-6 : f32
    %135 = vector.broadcast %cst_65 : f32 to vector<8x1xf32>
    %136 = arith.addf %132, %135 : vector<8x1xf32>
    %137 = math.rsqrt %136 : vector<8x1xf32>
    %138 = vector.broadcast %137 : vector<8x1xf32> to vector<8x32xf32>
    %139 = arith.mulf %134, %138 : vector<8x32xf32>
    %c0_66 = arith.constant 0 : index
    %c0_67 = arith.constant 0 : index
    %140 = vector.load %arg8[%c0_66, %c0_67] : memref<1x32xf32, #tpu.memory_space<vmem>>, vector<1x32xf32>
    %141 = vector.broadcast %140 : vector<1x32xf32> to vector<8x32xf32>
    %142 = arith.mulf %139, %141 : vector<8x32xf32>
    %c0_68 = arith.constant 0 : index
    %c0_69 = arith.constant 0 : index
    %143 = vector.load %arg9[%c0_68, %c0_69] : memref<1x32xf32, #tpu.memory_space<vmem>>, vector<1x32xf32>
    %144 = vector.broadcast %143 : vector<1x32xf32> to vector<8x32xf32>
    %145 = arith.addf %142, %144 : vector<8x32xf32>
    %146 = arith.truncf %145 : vector<8x32xf32> to vector<8x32xbf16>
    %cst_70 = arith.constant 0.000000e+00 : f32
    %147 = vector.broadcast %cst_70 : f32 to vector<8x32xf32>
    %c0_71 = arith.constant 0 : index
    %c0_72 = arith.constant 0 : index
    %148 = vector.load %arg10[%c0_71, %c0_72] : memref<32x128xbf16, #tpu.memory_space<vmem>>, vector<32x128xbf16>
    %cst_73 = arith.constant dense<0.000000e+00> : vector<8x128xf32>
    %149 = tpu.matmul %146, %148, %cst_73 {dimension_numbers = #tpu.dot_dimension_numbers<[1], [0], [0], [1], [0, 0, 1, 1], [], []>} : vector<8x32xbf16>, vector<32x128xbf16>, vector<8x128xf32> -> vector<8x128xf32>
    %c0_74 = arith.constant 0 : index
    %c0_75 = arith.constant 0 : index
    %150 = vector.load %arg11[%c0_74, %c0_75] : memref<1x128xf32, #tpu.memory_space<vmem>>, vector<1x128xf32>
    %151 = vector.broadcast %150 : vector<1x128xf32> to vector<8x128xf32>
    %152 = arith.addf %149, %151 : vector<8x128xf32>
    %cst_76 = arith.constant 1.702000e+00 : f32
    %153 = vector.broadcast %cst_76 : f32 to vector<8x128xf32>
    %154 = arith.mulf %153, %152 : vector<8x128xf32>
    %155 = arith.negf %154 : vector<8x128xf32>
    %156 = math.exp %155 : vector<8x128xf32>
    %cst_77 = arith.constant 1.000000e+00 : f32
    %157 = vector.broadcast %cst_77 : f32 to vector<8x128xf32>
    %158 = arith.addf %157, %156 : vector<8x128xf32>
    %159 = arith.divf %157, %158 : vector<8x128xf32>
    %160 = arith.mulf %152, %159 : vector<8x128xf32>
    %161 = arith.truncf %160 : vector<8x128xf32> to vector<8x128xbf16>
    %c0_78 = arith.constant 0 : index
    %c0_79 = arith.constant 0 : index
    %162 = vector.load %arg12[%c0_78, %c0_79] : memref<128x32xbf16, #tpu.memory_space<vmem>>, vector<128x32xbf16>
    %cst_80 = arith.constant dense<0.000000e+00> : vector<8x32xf32>
    %163 = tpu.matmul %161, %162, %cst_80 {dimension_numbers = #tpu.dot_dimension_numbers<[1], [0], [0], [1], [0, 0, 1, 1], [], []>} : vector<8x128xbf16>, vector<128x32xbf16>, vector<8x32xf32> -> vector<8x32xf32>
    %164 = arith.addf %147, %163 : vector<8x32xf32>
    %c0_81 = arith.constant 0 : index
    %c0_82 = arith.constant 0 : index
    %165 = vector.load %arg13[%c0_81, %c0_82] : memref<1x32xf32, #tpu.memory_space<vmem>>, vector<1x32xf32>
    %166 = vector.broadcast %165 : vector<1x32xf32> to vector<8x32xf32>
    %167 = arith.addf %164, %166 : vector<8x32xf32>
    %168 = arith.addf %167, %121 : vector<8x32xf32>
    %169 = vector.shape_cast %168 : vector<8x32xf32> to vector<1x8x32xf32>
    %c0_83 = arith.constant 0 : index
    %c0_84 = arith.constant 0 : index
    %c0_85 = arith.constant 0 : index
    %170 = vector.load %arg14[%c0_83, %c0_84, %c0_85] : memref<1x8x32xf32, #tpu.memory_space<vmem>>, vector<1x8x32xf32>
    tpu.vector_store %arg14[%c0_83, %c0_84, %c0_85], %169 {strides = array<i32>} : memref<1x8x32xf32, #tpu.memory_space<vmem>>, vector<1x8x32xf32>,
    return
  }
  func.func @transform_0(%arg0: i32) -> (i32, i32, i32) {
    %c0_i32 = arith.constant 0 : i32
    %c0_i32_0 = arith.constant 0 : i32
    %c0_i32_1 = arith.constant 0 : i32
    return %arg0, %c0_i32, %c0_i32_0 : i32, i32, i32
  }
  func.func @transform_1(%arg0: i32) -> (i32, i32) {
    %c0_i32 = arith.constant 0 : i32
    %c0_i32_0 = arith.constant 0 : i32
    %c0_i32_1 = arith.constant 0 : i32
    return %c0_i32, %c0_i32_0 : i32, i32
  }
  func.func @transform_2(%arg0: i32) -> (i32, i32) {
    %c0_i32 = arith.constant 0 : i32
    %c0_i32_0 = arith.constant 0 : i32
    %c0_i32_1 = arith.constant 0 : i32
    return %c0_i32, %c0_i32_0 : i32, i32
  }
  func.func @transform_3(%arg0: i32) -> (i32, i32) {
    %c0_i32 = arith.constant 0 : i32
    %c0_i32_0 = arith.constant 0 : i32
    %c0_i32_1 = arith.constant 0 : i32
    return %c0_i32, %c0_i32_0 : i32, i32
  }
  func.func @transform_4(%arg0: i32) -> (i32, i32) {
    %c0_i32 = arith.constant 0 : i32
    %c0_i32_0 = arith.constant 0 : i32
    %c0_i32_1 = arith.constant 0 : i32
    return %c0_i32, %c0_i32_0 : i32, i32
  }
  func.func @transform_5(%arg0: i32) -> (i32, i32) {
    %c0_i32 = arith.constant 0 : i32
    %c0_i32_0 = arith.constant 0 : i32
    %c0_i32_1 = arith.constant 0 : i32
    return %c0_i32, %c0_i32_0 : i32, i32
  }
  func.func @transform_6(%arg0: i32) -> (i32, i32) {
    %c0_i32 = arith.constant 0 : i32
    %c0_i32_0 = arith.constant 0 : i32
    %c0_i32_1 = arith.constant 0 : i32
    return %c0_i32, %c0_i32_0 : i32, i32
  }
  func.func @transform_7(%arg0: i32) -> (i32, i32) {
    %c0_i32 = arith.constant 0 : i32
    %c0_i32_0 = arith.constant 0 : i32
    %c0_i32_1 = arith.constant 0 : i32
    return %c0_i32, %c0_i32_0 : i32, i32
  }
  func.func @transform_8(%arg0: i32) -> (i32, i32) {
    %c0_i32 = arith.constant 0 : i32
    %c0_i32_0 = arith.constant 0 : i32
    %c0_i32_1 = arith.constant 0 : i32
    return %c0_i32, %c0_i32_0 : i32, i32
  }
  func.func @transform_9(%arg0: i32) -> (i32, i32) {
    %c0_i32 = arith.constant 0 : i32
    %c0_i32_0 = arith.constant 0 : i32
    %c0_i32_1 = arith.constant 0 : i32
    return %c0_i32, %c0_i32_0 : i32, i32
  }
  func.func @transform_10(%arg0: i32) -> (i32, i32) {
    %c0_i32 = arith.constant 0 : i32
    %c0_i32_0 = arith.constant 0 : i32
    %c0_i32_1 = arith.constant 0 : i32
    return %c0_i32, %c0_i32_0 : i32, i32
  }
  func.func @transform_11(%arg0: i32) -> (i32, i32) {
    %c0_i32 = arith.constant 0 : i32
    %c0_i32_0 = arith.constant 0 : i32
    %c0_i32_1 = arith.constant 0 : i32
    return %c0_i32, %c0_i32_0 : i32, i32
  }
  func.func @transform_12(%arg0: i32) -> (i32, i32) {
    %c0_i32 = arith.constant 0 : i32
    %c0_i32_0 = arith.constant 0 : i32
    %c0_i32_1 = arith.constant 0 : i32
    return %c0_i32, %c0_i32_0 : i32, i32
  }
  func.func @transform_13(%arg0: i32) -> (i32, i32, i32) {
    %c0_i32 = arith.constant 0 : i32
    %c0_i32_0 = arith.constant 0 : i32
    %c0_i32_1 = arith.constant 0 : i32
    return %arg0, %c0_i32, %c0_i32_0 : i32, i32, i32
  }
}

module attributes {stable_mosaic.version = 11 : i64} {
  func.func @clip_layer_kernel(%arg0: i32, %arg1: memref<1x8x32xf32, #tpu.memory_space<vmem>>, %arg2: memref<1x32xf32, #tpu.memory_space<vmem>>, %arg3: memref<1x32xf32, #tpu.memory_space<vmem>>, %arg4: memref<32x96xbf16, #tpu.memory_space<vmem>>, %arg5: memref<1x96xf32, #tpu.memory_space<vmem>>, %arg6: memref<32x32xbf16, #tpu.memory_space<vmem>>, %arg7: memref<1x32xf32, #tpu.memory_space<vmem>>, %arg8: memref<1x32xf32, #tpu.memory_space<vmem>>, %arg9: memref<1x32xf32, #tpu.memory_space<vmem>>, %arg10: memref<32x128xbf16, #tpu.memory_space<vmem>>, %arg11: memref<1x128xf32, #tpu.memory_space<vmem>>, %arg12: memref<128x32xbf16, #tpu.memory_space<vmem>>, %arg13: memref<1x32xf32, #tpu.memory_space<vmem>>, %arg14: memref<1x8x32xf32, #tpu.memory_space<vmem>>, %arg15: memref<8x96xbf16, #tpu.memory_space<vmem>>, %arg16: memref<8x32xbf16, #tpu.memory_space<vmem>>) attributes {dimension_semantics = [#tpu.dimension_semantics<parallel>], iteration_bounds = array<i64: 2>, scalar_prefetch = 0 : i64, scratch_operands = 2 : i64, tpu.core_type = #tpu.core_type<tc>, window_params = [{transform_indices = @transform_0, window_bounds = array<i64: 1, 8, 32>}, {pipeline_mode = #tpu.pipeline_mode<synchronous>, transform_indices = @transform_1, window_bounds = array<i64: 1, 32>}, {pipeline_mode = #tpu.pipeline_mode<synchronous>, transform_indices = @transform_2, window_bounds = array<i64: 1, 32>}, {pipeline_mode = #tpu.pipeline_mode<synchronous>, transform_indices = @transform_3, window_bounds = array<i64: 32, 96>}, {pipeline_mode = #tpu.pipeline_mode<synchronous>, transform_indices = @transform_4, window_bounds = array<i64: 1, 96>}, {pipeline_mode = #tpu.pipeline_mode<synchronous>, transform_indices = @transform_5, window_bounds = array<i64: 32, 32>}, {pipeline_mode = #tpu.pipeline_mode<synchronous>, transform_indices = @transform_6, window_bounds = array<i64: 1, 32>}, {pipeline_mode = #tpu.pipeline_mode<synchronous>, transform_indices = @transform_7, window_bounds = array<i64: 1, 32>}, {pipeline_mode = #tpu.pipeline_mode<synchronous>, transform_indices = @transform_8, window_bounds = array<i64: 1, 32>}, {pipeline_mode = #tpu.pipeline_mode<synchronous>, transform_indices = @transform_9, window_bounds = array<i64: 32, 128>}, {pipeline_mode = #tpu.pipeline_mode<synchronous>, transform_indices = @transform_10, window_bounds = array<i64: 1, 128>}, {pipeline_mode = #tpu.pipeline_mode<synchronous>, transform_indices = @transform_11, window_bounds = array<i64: 128, 32>}, {pipeline_mode = #tpu.pipeline_mode<synchronous>, transform_indices = @transform_12, window_bounds = array<i64: 1, 32>}, {transform_indices = @transform_13, window_bounds = array<i64: 1, 8, 32>}]} {
    %c0 = arith.constant 0 : index
    %c0_0 = arith.constant 0 : index
    %c0_1 = arith.constant 0 : index
    %0 = vector.load %arg1[%c0, %c0_0, %c0_1] : memref<1x8x32xf32, #tpu.memory_space<vmem>>, vector<1x8x32xf32>
    %1 = vector.shape_cast %0 : vector<1x8x32xf32> to vector<8x32xf32>
    %cst = arith.constant dense<0.000000e+00> : vector<8xf32>
    %2 = vector.multi_reduction <add>, %1, %cst [1] : vector<8x32xf32> to vector<8xf32>
    %3 = vector.shape_cast %2 : vector<8xf32> to vector<8x1xf32>
    %cst_2 = arith.constant 3.200000e+01 : f32
    %4 = vector.broadcast %cst_2 : f32 to vector<8x1xf32>
    %5 = arith.divf %3, %4 : vector<8x1xf32>
    %6 = vector.broadcast %5 : vector<8x1xf32> to vector<8x32xf32>
    %7 = arith.subf %1, %6 : vector<8x32xf32>
    %8 = arith.mulf %7, %7 : vector<8x32xf32>
    %cst_3 = arith.constant dense<0.000000e+00> : vector<8xf32>
    %9 = vector.multi_reduction <add>, %8, %cst_3 [1] : vector<8x32xf32> to vector<8xf32>
    %10 = vector.shape_cast %9 : vector<8xf32> to vector<8x1xf32>
    %cst_4 = arith.constant 3.200000e+01 : f32
    %11 = vector.broadcast %cst_4 : f32 to vector<8x1xf32>
    %12 = arith.divf %10, %11 : vector<8x1xf32>
    %13 = vector.broadcast %5 : vector<8x1xf32> to vector<8x32xf32>
    %14 = arith.subf %1, %13 : vector<8x32xf32>
    %cst_5 = arith.constant 9.99999974E-6 : f32
    %15 = vector.broadcast %cst_5 : f32 to vector<8x1xf32>
    %16 = arith.addf %12, %15 : vector<8x1xf32>
    %17 = math.rsqrt %16 : vector<8x1xf32>
    %18 = vector.broadcast %17 : vector<8x1xf32> to vector<8x32xf32>
    %19 = arith.mulf %14, %18 : vector<8x32xf32>
    %c0_6 = arith.constant 0 : index
    %c0_7 = arith.constant 0 : index
    %20 = vector.load %arg2[%c0_6, %c0_7] : memref<1x32xf32, #tpu.memory_space<vmem>>, vector<1x32xf32>
    %21 = vector.broadcast %20 : vector<1x32xf32> to vector<8x32xf32>
    %22 = arith.mulf %19, %21 : vector<8x32xf32>
    %c0_8 = arith.constant 0 : index
    %c0_9 = arith.constant 0 : index
    %23 = vector.load %arg3[%c0_8, %c0_9] : memref<1x32xf32, #tpu.memory_space<vmem>>, vector<1x32xf32>
    %24 = vector.broadcast %23 : vector<1x32xf32> to vector<8x32xf32>
    %25 = arith.addf %22, %24 : vector<8x32xf32>
    %26 = arith.truncf %25 : vector<8x32xf32> to vector<8x32xbf16>
    %c0_10 = arith.constant 0 : index
    %c0_11 = arith.constant 0 : index
    %27 = vector.load %arg4[%c0_10, %c0_11] : memref<32x96xbf16, #tpu.memory_space<vmem>>, vector<32x96xbf16>
    %cst_12 = arith.constant dense<0.000000e+00> : vector<8x96xf32>
    %28 = tpu.matmul %26, %27, %cst_12 {dimension_numbers = #tpu.dot_dimension_numbers<[1], [0], [0], [1], [0, 0, 1, 1], [], []>} : vector<8x32xbf16>, vector<32x96xbf16>, vector<8x96xf32> -> vector<8x96xf32>
    %c0_13 = arith.constant 0 : index
    %c0_14 = arith.constant 0 : index
    %29 = vector.load %arg5[%c0_13, %c0_14] : memref<1x96xf32, #tpu.memory_space<vmem>>, vector<1x96xf32>
    %30 = vector.broadcast %29 : vector<1x96xf32> to vector<8x96xf32>
    %31 = arith.addf %28, %30 : vector<8x96xf32>
    %32 = arith.truncf %31 : vector<8x96xf32> to vector<8x96xbf16>
    %c0_15 = arith.constant 0 : index
    %c0_16 = arith.constant 0 : index
    %33 = vector.load %arg15[%c0_15, %c0_16] : memref<8x96xbf16, #tpu.memory_space<vmem>>, vector<8x96xbf16>
    tpu.vector_store %arg15[%c0_15, %c0_16], %32 {strides = array<i32>} : memref<8x96xbf16, #tpu.memory_space<vmem>>, vector<8x96xbf16>,
    %34 = tpu.iota {dimensions = array<i32: 0>} : vector<8x8xi32>
    %35 = tpu.iota {dimensions = array<i32: 1>} : vector<8x8xi32>
    %36 = arith.cmpi sgt, %35, %34 : vector<8x8xi32>
    %c0_17 = arith.constant 0 : index
    %c0_18 = arith.constant 0 : index
    %37 = vector.load %arg15[%c0_17, %c0_18] : memref<8x96xbf16, #tpu.memory_space<vmem>>, vector<8x8xbf16>
    %c0_19 = arith.constant 0 : index
    %c32 = arith.constant 32 : index
    %38 = vector.load %arg15[%c0_19, %c32] : memref<8x96xbf16, #tpu.memory_space<vmem>>, vector<8x8xbf16>
    %c0_20 = arith.constant 0 : index
    %c64 = arith.constant 64 : index
    %39 = vector.load %arg15[%c0_20, %c64] : memref<8x96xbf16, #tpu.memory_space<vmem>>, vector<8x8xbf16>
    %cst_21 = arith.constant dense<0.000000e+00> : vector<8x8xf32>
    %40 = tpu.matmul %37, %38, %cst_21 {dimension_numbers = #tpu.dot_dimension_numbers<[1], [1], [0], [0], [0, 0, 1, 0], [], []>} : vector<8x8xbf16>, vector<8x8xbf16>, vector<8x8xf32> -> vector<8x8xf32>
    %cst_22 = arith.constant 0xFF800000 : f32
    %41 = vector.broadcast %cst_22 : f32 to vector<8x8xf32>
    %42 = arith.select %36, %41, %40 : vector<8x8xi1>, vector<8x8xf32>
    %cst_23 = arith.constant dense<0xFF800000> : vector<8xf32>
    %43 = vector.multi_reduction <maximumf>, %42, %cst_23 [1] : vector<8x8xf32> to vector<8xf32>
    %44 = vector.shape_cast %43 : vector<8xf32> to vector<8x1xf32>
    %45 = vector.broadcast %44 : vector<8x1xf32> to vector<8x8xf32>
    %46 = arith.subf %42, %45 : vector<8x8xf32>
    %47 = math.exp %46 : vector<8x8xf32>
    %cst_24 = arith.constant dense<0.000000e+00> : vector<8xf32>
    %48 = vector.multi_reduction <add>, %47, %cst_24 [1] : vector<8x8xf32> to vector<8xf32>
    %49 = vector.shape_cast %48 : vector<8xf32> to vector<8x1xf32>
    %50 = tpu.reciprocal %49 {approx = true} : vector<8x1xf32> -> vector<8x1xf32>
    %51 = vector.broadcast %50 : vector<8x1xf32> to vector<8x8xf32>
    %52 = arith.mulf %47, %51 : vector<8x8xf32>
    %53 = arith.truncf %52 : vector<8x8xf32> to vector<8x8xbf16>
    %cst_25 = arith.constant dense<0.000000e+00> : vector<8x8xf32>
    %54 = tpu.matmul %53, %39, %cst_25 {dimension_numbers = #tpu.dot_dimension_numbers<[1], [0], [0], [1], [0, 0, 1, 1], [], []>} : vector<8x8xbf16>, vector<8x8xbf16>, vector<8x8xf32> -> vector<8x8xf32>
    %c0_26 = arith.constant 0 : index
    %c8 = arith.constant 8 : index
    %55 = vector.load %arg15[%c0_26, %c8] : memref<8x96xbf16, #tpu.memory_space<vmem>>, vector<8x8xbf16>
    %c0_27 = arith.constant 0 : index
    %c40 = arith.constant 40 : index
    %56 = vector.load %arg15[%c0_27, %c40] : memref<8x96xbf16, #tpu.memory_space<vmem>>, vector<8x8xbf16>
    %c0_28 = arith.constant 0 : index
    %c72 = arith.constant 72 : index
    %57 = vector.load %arg15[%c0_28, %c72] : memref<8x96xbf16, #tpu.memory_space<vmem>>, vector<8x8xbf16>
    %cst_29 = arith.constant dense<0.000000e+00> : vector<8x8xf32>
    %58 = tpu.matmul %55, %56, %cst_29 {dimension_numbers = #tpu.dot_dimension_numbers<[1], [1], [0], [0], [0, 0, 1, 0], [], []>} : vector<8x8xbf16>, vector<8x8xbf16>, vector<8x8xf32> -> vector<8x8xf32>
    %cst_30 = arith.constant 0xFF800000 : f32
    %59 = vector.broadcast %cst_30 : f32 to vector<8x8xf32>
    %60 = arith.select %36, %59, %58 : vector<8x8xi1>, vector<8x8xf32>
    %cst_31 = arith.constant dense<0xFF800000> : vector<8xf32>
    %61 = vector.multi_reduction <maximumf>, %60, %cst_31 [1] : vector<8x8xf32> to vector<8xf32>
    %62 = vector.shape_cast %61 : vector<8xf32> to vector<8x1xf32>
    %63 = vector.broadcast %62 : vector<8x1xf32> to vector<8x8xf32>
    %64 = arith.subf %60, %63 : vector<8x8xf32>
    %65 = math.exp %64 : vector<8x8xf32>
    %cst_32 = arith.constant dense<0.000000e+00> : vector<8xf32>
    %66 = vector.multi_reduction <add>, %65, %cst_32 [1] : vector<8x8xf32> to vector<8xf32>
    %67 = vector.shape_cast %66 : vector<8xf32> to vector<8x1xf32>
    %68 = tpu.reciprocal %67 {approx = true} : vector<8x1xf32> -> vector<8x1xf32>
    %69 = vector.broadcast %68 : vector<8x1xf32> to vector<8x8xf32>
    %70 = arith.mulf %65, %69 : vector<8x8xf32>
    %71 = arith.truncf %70 : vector<8x8xf32> to vector<8x8xbf16>
    %cst_33 = arith.constant dense<0.000000e+00> : vector<8x8xf32>
    %72 = tpu.matmul %71, %57, %cst_33 {dimension_numbers = #tpu.dot_dimension_numbers<[1], [0], [0], [1], [0, 0, 1, 1], [], []>} : vector<8x8xbf16>, vector<8x8xbf16>, vector<8x8xf32> -> vector<8x8xf32>
    %73 = tpu.concatenate %54, %72 in 1 : vector<8x8xf32>, vector<8x8xf32> -> vector<8x16xf32>
    %74 = arith.truncf %73 : vector<8x16xf32> to vector<8x16xbf16>
    %c0_34 = arith.constant 0 : index
    %c0_35 = arith.constant 0 : index
    %75 = vector.load %arg16[%c0_34, %c0_35] : memref<8x32xbf16, #tpu.memory_space<vmem>>, vector<8x16xbf16>
    tpu.vector_store %arg16[%c0_34, %c0_35], %74 {strides = array<i32>} : memref<8x32xbf16, #tpu.memory_space<vmem>>, vector<8x16xbf16>,
    %c0_36 = arith.constant 0 : index
    %c16 = arith.constant 16 : index
    %76 = vector.load %arg15[%c0_36, %c16] : memref<8x96xbf16, #tpu.memory_space<vmem>>, vector<8x8xbf16>
    %c0_37 = arith.constant 0 : index
    %c48 = arith.constant 48 : index
    %77 = vector.load %arg15[%c0_37, %c48] : memref<8x96xbf16, #tpu.memory_space<vmem>>, vector<8x8xbf16>
    %c0_38 = arith.constant 0 : index
    %c80 = arith.constant 80 : index
    %78 = vector.load %arg15[%c0_38, %c80] : memref<8x96xbf16, #tpu.memory_space<vmem>>, vector<8x8xbf16>
    %cst_39 = arith.constant dense<0.000000e+00> : vector<8x8xf32>
    %79 = tpu.matmul %76, %77, %cst_39 {dimension_numbers = #tpu.dot_dimension_numbers<[1], [1], [0], [0], [0, 0, 1, 0], [], []>} : vector<8x8xbf16>, vector<8x8xbf16>, vector<8x8xf32> -> vector<8x8xf32>
    %cst_40 = arith.constant 0xFF800000 : f32
    %80 = vector.broadcast %cst_40 : f32 to vector<8x8xf32>
    %81 = arith.select %36, %80, %79 : vector<8x8xi1>, vector<8x8xf32>
    %cst_41 = arith.constant dense<0xFF800000> : vector<8xf32>
    %82 = vector.multi_reduction <maximumf>, %81, %cst_41 [1] : vector<8x8xf32> to vector<8xf32>
    %83 = vector.shape_cast %82 : vector<8xf32> to vector<8x1xf32>
    %84 = vector.broadcast %83 : vector<8x1xf32> to vector<8x8xf32>
    %85 = arith.subf %81, %84 : vector<8x8xf32>
    %86 = math.exp %85 : vector<8x8xf32>
    %cst_42 = arith.constant dense<0.000000e+00> : vector<8xf32>
    %87 = vector.multi_reduction <add>, %86, %cst_42 [1] : vector<8x8xf32> to vector<8xf32>
    %88 = vector.shape_cast %87 : vector<8xf32> to vector<8x1xf32>
    %89 = tpu.reciprocal %88 {approx = true} : vector<8x1xf32> -> vector<8x1xf32>
    %90 = vector.broadcast %89 : vector<8x1xf32> to vector<8x8xf32>
    %91 = arith.mulf %86, %90 : vector<8x8xf32>
    %92 = arith.truncf %91 : vector<8x8xf32> to vector<8x8xbf16>
    %cst_43 = arith.constant dense<0.000000e+00> : vector<8x8xf32>
    %93 = tpu.matmul %92, %78, %cst_43 {dimension_numbers = #tpu.dot_dimension_numbers<[1], [0], [0], [1], [0, 0, 1, 1], [], []>} : vector<8x8xbf16>, vector<8x8xbf16>, vector<8x8xf32> -> vector<8x8xf32>
    %c0_44 = arith.constant 0 : index
    %c24 = arith.constant 24 : index
    %94 = vector.load %arg15[%c0_44, %c24] : memref<8x96xbf16, #tpu.memory_space<vmem>>, vector<8x8xbf16>
    %c0_45 = arith.constant 0 : index
    %c56 = arith.constant 56 : index
    %95 = vector.load %arg15[%c0_45, %c56] : memref<8x96xbf16, #tpu.memory_space<vmem>>, vector<8x8xbf16>
    %c0_46 = arith.constant 0 : index
    %c88 = arith.constant 88 : index
    %96 = vector.load %arg15[%c0_46, %c88] : memref<8x96xbf16, #tpu.memory_space<vmem>>, vector<8x8xbf16>
    %cst_47 = arith.constant dense<0.000000e+00> : vector<8x8xf32>
    %97 = tpu.matmul %94, %95, %cst_47 {dimension_numbers = #tpu.dot_dimension_numbers<[1], [1], [0], [0], [0, 0, 1, 0], [], []>} : vector<8x8xbf16>, vector<8x8xbf16>, vector<8x8xf32> -> vector<8x8xf32>
    %cst_48 = arith.constant 0xFF800000 : f32
    %98 = vector.broadcast %cst_48 : f32 to vector<8x8xf32>
    %99 = arith.select %36, %98, %97 : vector<8x8xi1>, vector<8x8xf32>
    %cst_49 = arith.constant dense<0xFF800000> : vector<8xf32>
    %100 = vector.multi_reduction <maximumf>, %99, %cst_49 [1] : vector<8x8xf32> to vector<8xf32>
    %101 = vector.shape_cast %100 : vector<8xf32> to vector<8x1xf32>
    %102 = vector.broadcast %101 : vector<8x1xf32> to vector<8x8xf32>
    %103 = arith.subf %99, %102 : vector<8x8xf32>
    %104 = math.exp %103 : vector<8x8xf32>
    %cst_50 = arith.constant dense<0.000000e+00> : vector<8xf32>
    %105 = vector.multi_reduction <add>, %104, %cst_50 [1] : vector<8x8xf32> to vector<8xf32>
    %106 = vector.shape_cast %105 : vector<8xf32> to vector<8x1xf32>
    %107 = tpu.reciprocal %106 {approx = true} : vector<8x1xf32> -> vector<8x1xf32>
    %108 = vector.broadcast %107 : vector<8x1xf32> to vector<8x8xf32>
    %109 = arith.mulf %104, %108 : vector<8x8xf32>
    %110 = arith.truncf %109 : vector<8x8xf32> to vector<8x8xbf16>
    %cst_51 = arith.constant dense<0.000000e+00> : vector<8x8xf32>
    %111 = tpu.matmul %110, %96, %cst_51 {dimension_numbers = #tpu.dot_dimension_numbers<[1], [0], [0], [1], [0, 0, 1, 1], [], []>} : vector<8x8xbf16>, vector<8x8xbf16>, vector<8x8xf32> -> vector<8x8xf32>
    %112 = tpu.concatenate %93, %111 in 1 : vector<8x8xf32>, vector<8x8xf32> -> vector<8x16xf32>
    %113 = arith.truncf %112 : vector<8x16xf32> to vector<8x16xbf16>
    %c0_52 = arith.constant 0 : index
    %c16_53 = arith.constant 16 : index
    %114 = vector.load %arg16[%c0_52, %c16_53] : memref<8x32xbf16, #tpu.memory_space<vmem>>, vector<8x16xbf16>
    tpu.vector_store %arg16[%c0_52, %c16_53], %113 {strides = array<i32>} : memref<8x32xbf16, #tpu.memory_space<vmem>>, vector<8x16xbf16>,
    %c0_54 = arith.constant 0 : index
    %c0_55 = arith.constant 0 : index
    %115 = vector.load %arg16[%c0_54, %c0_55] : memref<8x32xbf16, #tpu.memory_space<vmem>>, vector<8x32xbf16>
    %c0_56 = arith.constant 0 : index
    %c0_57 = arith.constant 0 : index
    %116 = vector.load %arg6[%c0_56, %c0_57] : memref<32x32xbf16, #tpu.memory_space<vmem>>, vector<32x32xbf16>
    %cst_58 = arith.constant dense<0.000000e+00> : vector<8x32xf32>
    %117 = tpu.matmul %115, %116, %cst_58 {dimension_numbers = #tpu.dot_dimension_numbers<[1], [0], [0], [1], [0, 0, 1, 1], [], []>} : vector<8x32xbf16>, vector<32x32xbf16>, vector<8x32xf32> -> vector<8x32xf32>
    %c0_59 = arith.constant 0 : index
    %c0_60 = arith.constant 0 : index
    %118 = vector.load %arg7[%c0_59, %c0_60] : memref<1x32xf32, #tpu.memory_space<vmem>>, vector<1x32xf32>
    %119 = vector.broadcast %118 : vector<1x32xf32> to vector<8x32xf32>
    %120 = arith.addf %117, %119 : vector<8x32xf32>
    %121 = arith.addf %120, %1 : vector<8x32xf32>
    %cst_61 = arith.constant dense<0.000000e+00> : vector<8xf32>
    %122 = vector.multi_reduction <add>, %121, %cst_61 [1] : vector<8x32xf32> to vector<8xf32>
    %123 = vector.shape_cast %122 : vector<8xf32> to vector<8x1xf32>
    %cst_62 = arith.constant 3.200000e+01 : f32
    %124 = vector.broadcast %cst_62 : f32 to vector<8x1xf32>
    %125 = arith.divf %123, %124 : vector<8x1xf32>
    %126 = vector.broadcast %125 : vector<8x1xf32> to vector<8x32xf32>
    %127 = arith.subf %121, %126 : vector<8x32xf32>
    %128 = arith.mulf %127, %127 : vector<8x32xf32>
    %cst_63 = arith.constant dense<0.000000e+00> : vector<8xf32>
    %129 = vector.multi_reduction <add>, %128, %cst_63 [1] : vector<8x32xf32> to vector<8xf32>
    %130 = vector.shape_cast %129 : vector<8xf32> to vector<8x1xf32>
    %cst_64 = arith.constant 3.200000e+01 : f32
    %131 = vector.broadcast %cst_64 : f32 to vector<8x1xf32>
    %132 = arith.divf %130, %131 : vector<8x1xf32>
    %133 = vector.broadcast %125 : vector<8x1xf32> to vector<8x32xf32>
    %134 = arith.subf %121, %133 : vector<8x32xf32>
    %cst_65 = arith.constant 9.99999974E-6 : f32
    %135 = vector.broadcast %cst_65 : f32 to vector<8x1xf32>
    %136 = arith.addf %132, %135 : vector<8x1xf32>
    %137 = math.rsqrt %136 : vector<8x1xf32>
    %138 = vector.broadcast %137 : vector<8x1xf32> to vector<8x32xf32>
    %139 = arith.mulf %134, %138 : vector<8x32xf32>
    %c0_66 = arith.constant 0 : index
    %c0_67 = arith.constant 0 : index
    %140 = vector.load %arg8[%c0_66, %c0_67] : memref<1x32xf32, #tpu.memory_space<vmem>>, vector<1x32xf32>
    %141 = vector.broadcast %140 : vector<1x32xf32> to vector<8x32xf32>
    %142 = arith.mulf %139, %141 : vector<8x32xf32>
    %c0_68 = arith.constant 0 : index
    %c0_69 = arith.constant 0 : index
    %143 = vector.load %arg9[%c0_68, %c0_69] : memref<1x32xf32, #tpu.memory_space<vmem>>, vector<1x32xf32>
    %144 = vector.broadcast %143 : vector<1x32xf32> to vector<8x32xf32>
    %145 = arith.addf %142, %144 : vector<8x32xf32>
    %146 = arith.truncf %145 : vector<8x32xf32> to vector<8x32xbf16>
    %cst_70 = arith.constant 0.000000e+00 : f32
    %147 = vector.broadcast %cst_70 : f32 to vector<8x32xf32>
    %c0_71 = arith.constant 0 : index
    %c0_72 = arith.constant 0 : index
    %148 = vector.load %arg10[%c0_71, %c0_72] : memref<32x128xbf16, #tpu.memory_space<vmem>>, vector<32x128xbf16>
    %cst_73 = arith.constant dense<0.000000e+00> : vector<8x128xf32>
    %149 = tpu.matmul %146, %148, %cst_73 {dimension_numbers = #tpu.dot_dimension_numbers<[1], [0], [0], [1], [0, 0, 1, 1], [], []>} : vector<8x32xbf16>, vector<32x128xbf16>, vector<8x128xf32> -> vector<8x128xf32>
    %c0_74 = arith.constant 0 : index
    %c0_75 = arith.constant 0 : index
    %150 = vector.load %arg11[%c0_74, %c0_75] : memref<1x128xf32, #tpu.memory_space<vmem>>, vector<1x128xf32>
    %151 = vector.broadcast %150 : vector<1x128xf32> to vector<8x128xf32>
    %152 = arith.addf %149, %151 : vector<8x128xf32>
    %cst_76 = arith.constant 1.702000e+00 : f32
    %153 = vector.broadcast %cst_76 : f32 to vector<8x128xf32>
    %154 = arith.mulf %153, %152 : vector<8x128xf32>
    %155 = arith.negf %154 : vector<8x128xf32>
    %156 = math.exp %155 : vector<8x128xf32>
    %cst_77 = arith.constant 1.000000e+00 : f32
    %157 = vector.broadcast %cst_77 : f32 to vector<8x128xf32>
    %158 = arith.addf %157, %156 : vector<8x128xf32>
    %159 = arith.divf %157, %158 : vector<8x128xf32>
    %160 = arith.mulf %152, %159 : vector<8x128xf32>
    %161 = arith.truncf %160 : vector<8x128xf32> to vector<8x128xbf16>
    %c0_78 = arith.constant 0 : index
    %c0_79 = arith.constant 0 : index
    %162 = vector.load %arg12[%c0_78, %c0_79] : memref<128x32xbf16, #tpu.memory_space<vmem>>, vector<128x32xbf16>
    %cst_80 = arith.constant dense<0.000000e+00> : vector<8x32xf32>
    %163 = tpu.matmul %161, %162, %cst_80 {dimension_numbers = #tpu.dot_dimension_numbers<[1], [0], [0], [1], [0, 0, 1, 1], [], []>} : vector<8x128xbf16>, vector<128x32xbf16>, vector<8x32xf32> -> vector<8x32xf32>
    %164 = arith.addf %147, %163 : vector<8x32xf32>
    %c0_81 = arith.constant 0 : index
    %c0_82 = arith.constant 0 : index
    %165 = vector.load %arg13[%c0_81, %c0_82] : memref<1x32xf32, #tpu.memory_space<vmem>>, vector<1x32xf32>
    %166 = vector.broadcast %165 : vector<1x32xf32> to vector<8x32xf32>
    %167 = arith.addf %164, %166 : vector<8x32xf32>
    %168 = arith.addf %167, %121 : vector<8x32xf32>
    %169 = vector.shape_cast %168 : vector<8x32xf32> to vector<1x8x32xf32>
    %c0_83 = arith.constant 0 : index
    %c0_84 = arith.constant 0 : index
    %c0_85 = arith.constant 0 : index
    %170 = vector.load %arg14[%c0_83, %c0_84, %c0_85] : memref<1x8x32xf32, #tpu.memory_space<vmem>>, vector<1x8x32xf32>
    tpu.vector_store %arg14[%c0_83, %c0_84, %c0_85], %169 {strides = array<i32>} : memref<1x8x32xf32, #tpu.memory_space<vmem>>, vector<1x8x32xf32>,
    return
  }
  func.func @transform_0(%arg0: i32) -> (i32, i32, i32) {
    %c0_i32 = arith.constant 0 : i32
    %c0_i32_0 = arith.constant 0 : i32
    %c0_i32_1 = arith.constant 0 : i32
    return %arg0, %c0_i32, %c0_i32_0 : i32, i32, i32
  }
  func.func @transform_1(%arg0: i32) -> (i32, i32) {
    %c0_i32 = arith.constant 0 : i32
    %c0_i32_0 = arith.constant 0 : i32
    %c0_i32_1 = arith.constant 0 : i32
    return %c0_i32, %c0_i32_0 : i32, i32
  }
  func.func @transform_2(%arg0: i32) -> (i32, i32) {
    %c0_i32 = arith.constant 0 : i32
    %c0_i32_0 = arith.constant 0 : i32
    %c0_i32_1 = arith.constant 0 : i32
    return %c0_i32, %c0_i32_0 : i32, i32
  }
  func.func @transform_3(%arg0: i32) -> (i32, i32) {
    %c0_i32 = arith.constant 0 : i32
    %c0_i32_0 = arith.constant 0 : i32
    %c0_i32_1 = arith.constant 0 : i32
    return %c0_i32, %c0_i32_0 : i32, i32
  }
  func.func @transform_4(%arg0: i32) -> (i32, i32) {
    %c0_i32 = arith.constant 0 : i32
    %c0_i32_0 = arith.constant 0 : i32
    %c0_i32_1 = arith.constant 0 : i32
    return %c0_i32, %c0_i32_0 : i32, i32
  }
  func.func @transform_5(%arg0: i32) -> (i32, i32) {
    %c0_i32 = arith.constant 0 : i32
    %c0_i32_0 = arith.constant 0 : i32
    %c0_i32_1 = arith.constant 0 : i32
    return %c0_i32, %c0_i32_0 : i32, i32
  }
  func.func @transform_6(%arg0: i32) -> (i32, i32) {
    %c0_i32 = arith.constant 0 : i32
    %c0_i32_0 = arith.constant 0 : i32
    %c0_i32_1 = arith.constant 0 : i32
    return %c0_i32, %c0_i32_0 : i32, i32
  }
  func.func @transform_7(%arg0: i32) -> (i32, i32) {
    %c0_i32 = arith.constant 0 : i32
    %c0_i32_0 = arith.constant 0 : i32
    %c0_i32_1 = arith.constant 0 : i32
    return %c0_i32, %c0_i32_0 : i32, i32
  }
  func.func @transform_8(%arg0: i32) -> (i32, i32) {
    %c0_i32 = arith.constant 0 : i32
    %c0_i32_0 = arith.constant 0 : i32
    %c0_i32_1 = arith.constant 0 : i32
    return %c0_i32, %c0_i32_0 : i32, i32
  }
  func.func @transform_9(%arg0: i32) -> (i32, i32) {
    %c0_i32 = arith.constant 0 : i32
    %c0_i32_0 = arith.constant 0 : i32
    %c0_i32_1 = arith.constant 0 : i32
    return %c0_i32, %c0_i32_0 : i32, i32
  }
  func.func @transform_10(%arg0: i32) -> (i32, i32) {
    %c0_i32 = arith.constant 0 : i32
    %c0_i32_0 = arith.constant 0 : i32
    %c0_i32_1 = arith.constant 0 : i32
    return %c0_i32, %c0_i32_0 : i32, i32
  }
  func.func @transform_11(%arg0: i32) -> (i32, i32) {
    %c0_i32 = arith.constant 0 : i32
    %c0_i32_0 = arith.constant 0 : i32
    %c0_i32_1 = arith.constant 0 : i32
    return %c0_i32, %c0_i32_0 : i32, i32
  }
  func.func @transform_12(%arg0: i32) -> (i32, i32) {
    %c0_i32 = arith.constant 0 : i32
    %c0_i32_0 = arith.constant 0 : i32
    %c0_i32_1 = arith.constant 0 : i32
    return %c0_i32, %c0_i32_0 : i32, i32
  }
  func.func @transform_13(%arg0: i32) -> (i32, i32, i32) {
    %c0_i32 = arith.constant 0 : i32
    %c0_i32_0 = arith.constant 0 : i32
    %c0_i32_1 = arith.constant 0 : i32
    return %arg0, %c0_i32, %c0_i32_0 : i32, i32, i32
  }
}

</mosaic_0001>

<llo_original>
// kernel: tpu_custom_call.1
$region0: #{tpu_custom_call.1}
  #allocation0 [shape = 'u32[]', space=smem, size = 0x4, offset = 0x4, fixed_abs, tag = 'smem constant byte address 0x4 - core index']
  #allocation1 [shape = 'u32[72,128]{1,0:T(1,128)}', space=vmem, size = 0x9000, scoped, tag = 'internal scratch']
  #allocation2 [shape = 'bf16[8,96]{1,0:T(8,128)(2,1)}', space=vmem, size = 0x800, scoped, tag = 'scratch operand']
  #allocation3 [shape = 'bf16[8,32]{1,0:T(8,128)(2,1)}', space=vmem, size = 0x800, scoped, tag = 'scratch operand']
  %s0 = inlined_call_operand.vmem [shape: f32[2,8,32], index: 0, kind: input, shape index: {}]
  %s1 = inlined_call_operand.vmem [shape: f32[1,32], index: 1, kind: input, shape index: {}]
  %s2 = inlined_call_operand.vmem [shape: f32[1,32], index: 2, kind: input, shape index: {}]
  %s3 = inlined_call_operand.vmem [shape: bf16[32,96], index: 3, kind: input, shape index: {}]
  %s4 = inlined_call_operand.vmem [shape: f32[1,96], index: 4, kind: input, shape index: {}]
  %s5 = inlined_call_operand.vmem [shape: bf16[32,32], index: 5, kind: input, shape index: {}]
  %s6 = inlined_call_operand.vmem [shape: f32[1,32], index: 6, kind: input, shape index: {}]
  %s7 = inlined_call_operand.vmem [shape: f32[1,32], index: 7, kind: input, shape index: {}]
  %s8 = inlined_call_operand.vmem [shape: f32[1,32], index: 8, kind: input, shape index: {}]
  %s9 = inlined_call_operand.vmem [shape: bf16[32,128], index: 9, kind: input, shape index: {}]
  %s10 = inlined_call_operand.vmem [shape: f32[1,128], index: 10, kind: input, shape index: {}]
  %s11 = inlined_call_operand.vmem [shape: bf16[128,32], index: 11, kind: input, shape index: {}]
  %s12 = inlined_call_operand.vmem [shape: f32[1,32], index: 12, kind: input, shape index: {}]
  %s13 = inlined_call_operand.hbm [shape: f32[2,8,32], index: 13, kind: output, shape index: {}]
  %s14 = sld [smem:[#allocation0]]
  $region85: #{tpu_custom_call.1} parent=0
    _
  %s16 = ssub.s32 1, %s14
  %s17 = scalar_select 0, %s16, %s14
  $region1: #{tpu_custom_call.1} parent=0
    #allocation4 [shape = 'u8[8192]{0}', space=vmem, size = 0x2000, scoped, tag = 'output window, operand 0']
    #allocation5 [shape = 's32[2]{0}', space=sflag, size = 0x8, scoped, tag = 'scoped memory for tpu_custom_call.1']
    %18 = vsyncpa [#allocation5], 0
    %s19 = scalar_lea.sflag [#allocation5], 1
    %20 = vsyncpa %s19, 0
    loop: start=0, step=1, limit=4
    $region2: #{tpu_custom_call.1} parent=1 // loop_pre_header
      _
    $region3: #{tpu_custom_call.1} parent=1 // loop_header
      %s22 = sphi 0, %s26
      %p23 = scmp.ge.s32.totalorder %s22, 4
      %s32 = sphi 0, %s34
      %s35 = sphi 0, %s32
      %s36 = sphi 0, %s35
      %s52 = sphi 0, %s36
      %s56 = sphi 0, %s56
      %s58 = sphi 0, %s56
      %s59 = sphi 0, %s58
      %s73 = sphi 0, %s59
      %s77 = sphi 0, %s77
      %s79 = sphi 0, %s77
      %s80 = sphi 0, %s79
      %s94 = sphi 0, %s80
      %s98 = sphi 0, %s98
      %s100 = sphi 0, %s98
      %s101 = sphi 0, %s100
      %s115 = sphi 0, %s101
      %s119 = sphi 0, %s119
      %s121 = sphi 0, %s119
      %s122 = sphi 0, %s121
      %s136 = sphi 0, %s122
      %s140 = sphi 0, %s140
      %s142 = sphi 0, %s140
      %s143 = sphi 0, %s142
      %s157 = sphi 0, %s143
      %s161 = sphi 0, %s161
      %s163 = sphi 0, %s161
      %s164 = sphi 0, %s163
      %s178 = sphi 0, %s164
      %s182 = sphi 0, %s182
      %s184 = sphi 0, %s182
      %s185 = sphi 0, %s184
      %s199 = sphi 0, %s185
      %s203 = sphi 0, %s203
      %s205 = sphi 0, %s203
      %s206 = sphi 0, %s205
      %s220 = sphi 0, %s206
      %s224 = sphi 0, %s224
      %s226 = sphi 0, %s224
      %s227 = sphi 0, %s226
      %s241 = sphi 0, %s227
      %s245 = sphi 0, %s245
      %s247 = sphi 0, %s245
      %s248 = sphi 0, %s247
      %s262 = sphi 0, %s248
      %s266 = sphi 0, %s266
      %s268 = sphi 0, %s266
      %s269 = sphi 0, %s268
      %s283 = sphi 0, %s269
      %s287 = sphi 0, %s287
      %s289 = sphi 0, %s287
      %s290 = sphi 0, %s289
      %s304 = sphi 0, %s290
      %s310 = sphi 0, %s312
      %s313 = sphi 0, %s310
      %s314 = sphi 0, %s313
      %s330 = sphi 0, %s314
    $region4: #{tpu_custom_call.1} parent=1 // loop_header_branch
      %25 = sbr.rel (%p23) target = $region8
    $region5: #{tpu_custom_call.1} parent=1 // loop_body
      %s27 = ssub.s32 %s22, 1
      %s28 = ssub.s32 %s22, 2
      %s29 = sadd.s32 %s22, 1
      %s30 = ssub.s32 %s22, %s29
      %p31 = scmp.eq.s32.totalorder %s30, 0
      %s33 = sadd.s32 %s32, 1
      %s34 = scalar_select %p31, %s32, %s33
      %p37 = pneg %p31
      %p38 = scmp.eq.s32.totalorder %s22, 1
      %p39 = por %p37, %p38
      %p40 = scmp.ne.s32.totalorder %s32, %s35
      %p41 = scmp.eq.s32.totalorder %s22, 0
      %p42 = por %p40, %p41
      %p43 = scmp.ne.s32.totalorder %s32, %s35
      %p44 = scmp.eq.s32.totalorder %s27, 1
      %p45 = por %p43, %p44
      %p46 = scmp.ne.s32.totalorder %s35, %s36
      %p47 = scmp.eq.s32.totalorder %s27, 0
      %p48 = por %p46, %p47
      %p49 = scmp.ne.s32.totalorder %s35, %s36
      %p50 = scmp.eq.s32.totalorder %s28, 1
      %p51 = por %p49, %p50
      %p53 = scmp.ne.s32.totalorder %s36, %s52
      %p54 = scmp.eq.s32.totalorder %s28, 0
      %p55 = por %p53, %p54
      %s57 = sadd.s32 %s56, 1
      %p60 = scmp.eq.s32.totalorder %s22, 1
      %p61 = scmp.ne.s32.totalorder %s56, %s58
      %p62 = scmp.eq.s32.totalorder %s22, 0
      %p63 = por %p61, %p62
      %p64 = scmp.ne.s32.totalorder %s56, %s58
      %p65 = scmp.eq.s32.totalorder %s27, 1
      %p66 = por %p64, %p65
      %p67 = scmp.ne.s32.totalorder %s58, %s59
      %p68 = scmp.eq.s32.totalorder %s27, 0
      %p69 = por %p67, %p68
      %p70 = scmp.ne.s32.totalorder %s58, %s59
      %p71 = scmp.eq.s32.totalorder %s28, 1
      %p72 = por %p70, %p71
      %p74 = scmp.ne.s32.totalorder %s59, %s73
      %p75 = scmp.eq.s32.totalorder %s28, 0
      %p76 = por %p74, %p75
      %s78 = sadd.s32 %s77, 1
      %p81 = scmp.eq.s32.totalorder %s22, 1
      %p82 = scmp.ne.s32.totalorder %s77, %s79
      %p83 = scmp.eq.s32.totalorder %s22, 0
      %p84 = por %p82, %p83
      %p85 = scmp.ne.s32.totalorder %s77, %s79
      %p86 = scmp.eq.s32.totalorder %s27, 1
      %p87 = por %p85, %p86
      %p88 = scmp.ne.s32.totalorder %s79, %s80
      %p89 = scmp.eq.s32.totalorder %s27, 0
      %p90 = por %p88, %p89
      %p91 = scmp.ne.s32.totalorder %s79, %s80
      %p92 = scmp.eq.s32.totalorder %s28, 1
      %p93 = por %p91, %p92
      %p95 = scmp.ne.s32.totalorder %s80, %s94
      %p96 = scmp.eq.s32.totalorder %s28, 0
      %p97 = por %p95, %p96
      %s99 = sadd.s32 %s98, 1
      %p102 = scmp.eq.s32.totalorder %s22, 1
      %p103 = scmp.ne.s32.totalorder %s98, %s100
      %p104 = scmp.eq.s32.totalorder %s22, 0
      %p105 = por %p103, %p104
      %p106 = scmp.ne.s32.totalorder %s98, %s100
      %p107 = scmp.eq.s32.totalorder %s27, 1
      %p108 = por %p106, %p107
      %p109 = scmp.ne.s32.totalorder %s100, %s101
      %p110 = scmp.eq.s32.totalorder %s27, 0
      %p111 = por %p109, %p110
      %p112 = scmp.ne.s32.totalorder %s100, %s101
      %p113 = scmp.eq.s32.totalorder %s28, 1
      %p114 = por %p112, %p113
      %p116 = scmp.ne.s32.totalorder %s101, %s115
      %p117 = scmp.eq.s32.totalorder %s28, 0
      %p118 = por %p116, %p117
      %s120 = sadd.s32 %s119, 1
      %p123 = scmp.eq.s32.totalorder %s22, 1
      %p124 = scmp.ne.s32.totalorder %s119, %s121
      %p125 = scmp.eq.s32.totalorder %s22, 0
      %p126 = por %p124, %p125
      %p127 = scmp.ne.s32.totalorder %s119, %s121
      %p128 = scmp.eq.s32.totalorder %s27, 1
      %p129 = por %p127, %p128
      %p130 = scmp.ne.s32.totalorder %s121, %s122
      %p131 = scmp.eq.s32.totalorder %s27, 0
      %p132 = por %p130, %p131
      %p133 = scmp.ne.s32.totalorder %s121, %s122
      %p134 = scmp.eq.s32.totalorder %s28, 1
      %p135 = por %p133, %p134
      %p137 = scmp.ne.s32.totalorder %s122, %s136
      %p138 = scmp.eq.s32.totalorder %s28, 0
      %p139 = por %p137, %p138
      %s141 = sadd.s32 %s140, 1
      %p144 = scmp.eq.s32.totalorder %s22, 1
      %p145 = scmp.ne.s32.totalorder %s140, %s142
      %p146 = scmp.eq.s32.totalorder %s22, 0
      %p147 = por %p145, %p146
      %p148 = scmp.ne.s32.totalorder %s140, %s142
      %p149 = scmp.eq.s32.totalorder %s27, 1
      %p150 = por %p148, %p149
      %p151 = scmp.ne.s32.totalorder %s142, %s143
      %p152 = scmp.eq.s32.totalorder %s27, 0
      %p153 = por %p151, %p152
      %p154 = scmp.ne.s32.totalorder %s142, %s143
      %p155 = scmp.eq.s32.totalorder %s28, 1
      %p156 = por %p154, %p155
      %p158 = scmp.ne.s32.totalorder %s143, %s157
      %p159 = scmp.eq.s32.totalorder %s28, 0
      %p160 = por %p158, %p159
      %s162 = sadd.s32 %s161, 1
      %p165 = scmp.eq.s32.totalorder %s22, 1
      %p166 = scmp.ne.s32.totalorder %s161, %s163
      %p167 = scmp.eq.s32.totalorder %s22, 0
      %p168 = por %p166, %p167
      %p169 = scmp.ne.s32.totalorder %s161, %s163
      %p170 = scmp.eq.s32.totalorder %s27, 1
      %p171 = por %p169, %p170
      %p172 = scmp.ne.s32.totalorder %s163, %s164
      %p173 = scmp.eq.s32.totalorder %s27, 0
      %p174 = por %p172, %p173
      %p175 = scmp.ne.s32.totalorder %s163, %s164
      %p176 = scmp.eq.s32.totalorder %s28, 1
      %p177 = por %p175, %p176
      %p179 = scmp.ne.s32.totalorder %s164, %s178
      %p180 = scmp.eq.s32.totalorder %s28, 0
      %p181 = por %p179, %p180
      %s183 = sadd.s32 %s182, 1
      %p186 = scmp.eq.s32.totalorder %s22, 1
      %p187 = scmp.ne.s32.totalorder %s182, %s184
      %p188 = scmp.eq.s32.totalorder %s22, 0
      %p189 = por %p187, %p188
      %p190 = scmp.ne.s32.totalorder %s182, %s184
      %p191 = scmp.eq.s32.totalorder %s27, 1
      %p192 = por %p190, %p191
      %p193 = scmp.ne.s32.totalorder %s184, %s185
      %p194 = scmp.eq.s32.totalorder %s27, 0
      %p195 = por %p193, %p194
      %p196 = scmp.ne.s32.totalorder %s184, %s185
      %p197 = scmp.eq.s32.totalorder %s28, 1
      %p198 = por %p196, %p197
      %p200 = scmp.ne.s32.totalorder %s185, %s199
      %p201 = scmp.eq.s32.totalorder %s28, 0
      %p202 = por %p200, %p201
      %s204 = sadd.s32 %s203, 1
      %p207 = scmp.eq.s32.totalorder %s22, 1
      %p208 = scmp.ne.s32.totalorder %s203, %s205
      %p209 = scmp.eq.s32.totalorder %s22, 0
      %p210 = por %p208, %p209
      %p211 = scmp.ne.s32.totalorder %s203, %s205
      %p212 = scmp.eq.s32.totalorder %s27, 1
      %p213 = por %p211, %p212
      %p214 = scmp.ne.s32.totalorder %s205, %s206
      %p215 = scmp.eq.s32.totalorder %s27, 0
      %p216 = por %p214, %p215
      %p217 = scmp.ne.s32.totalorder %s205, %s206
      %p218 = scmp.eq.s32.totalorder %s28, 1
      %p219 = por %p217, %p218
      %p221 = scmp.ne.s32.totalorder %s206, %s220
      %p222 = scmp.eq.s32.totalorder %s28, 0
      %p223 = por %p221, %p222
      %s225 = sadd.s32 %s224, 1
      %p228 = scmp.eq.s32.totalorder %s22, 1
      %p229 = scmp.ne.s32.totalorder %s224, %s226
      %p230 = scmp.eq.s32.totalorder %s22, 0
      %p231 = por %p229, %p230
      %p232 = scmp.ne.s32.totalorder %s224, %s226
      %p233 = scmp.eq.s32.totalorder %s27, 1
      %p234 = por %p232, %p233
      %p235 = scmp.ne.s32.totalorder %s226, %s227
      %p236 = scmp.eq.s32.totalorder %s27, 0
      %p237 = por %p235, %p236
      %p238 = scmp.ne.s32.totalorder %s226, %s227
      %p239 = scmp.eq.s32.totalorder %s28, 1
      %p240 = por %p238, %p239
      %p242 = scmp.ne.s32.totalorder %s227, %s241
      %p243 = scmp.eq.s32.totalorder %s28, 0
      %p244 = por %p242, %p243
      %s246 = sadd.s32 %s245, 1
      %p249 = scmp.eq.s32.totalorder %s22, 1
      %p250 = scmp.ne.s32.totalorder %s245, %s247
      %p251 = scmp.eq.s32.totalorder %s22, 0
      %p252 = por %p250, %p251
      %p253 = scmp.ne.s32.totalorder %s245, %s247
      %p254 = scmp.eq.s32.totalorder %s27, 1
      %p255 = por %p253, %p254
      %p256 = scmp.ne.s32.totalorder %s247, %s248
      %p257 = scmp.eq.s32.totalorder %s27, 0
      %p258 = por %p256, %p257
      %p259 = scmp.ne.s32.totalorder %s247, %s248
      %p260 = scmp.eq.s32.totalorder %s28, 1
      %p261 = por %p259, %p260
      %p263 = scmp.ne.s32.totalorder %s248, %s262
      %p264 = scmp.eq.s32.totalorder %s28, 0
      %p265 = por %p263, %p264
      %s267 = sadd.s32 %s266, 1
      %p270 = scmp.eq.s32.totalorder %s22, 1
      %p271 = scmp.ne.s32.totalorder %s266, %s268
      %p272 = scmp.eq.s32.totalorder %s22, 0
      %p273 = por %p271, %p272
      %p274 = scmp.ne.s32.totalorder %s266, %s268
      %p275 = scmp.eq.s32.totalorder %s27, 1
      %p276 = por %p274, %p275
      %p277 = scmp.ne.s32.totalorder %s268, %s269
      %p278 = scmp.eq.s32.totalorder %s27, 0
      %p279 = por %p277, %p278
      %p280 = scmp.ne.s32.totalorder %s268, %s269
      %p281 = scmp.eq.s32.totalorder %s28, 1
      %p282 = por %p280, %p281
      %p284 = scmp.ne.s32.totalorder %s269, %s283
      %p285 = scmp.eq.s32.totalorder %s28, 0
      %p286 = por %p284, %p285
      %s288 = sadd.s32 %s287, 1
      %p291 = scmp.eq.s32.totalorder %s22, 1
      %p292 = scmp.ne.s32.totalorder %s287, %s289
      %p293 = scmp.eq.s32.totalorder %s22, 0
      %p294 = por %p292, %p293
      %p295 = scmp.ne.s32.totalorder %s287, %s289
      %p296 = scmp.eq.s32.totalorder %s27, 1
      %p297 = por %p295, %p296
      %p298 = scmp.ne.s32.totalorder %s289, %s290
      %p299 = scmp.eq.s32.totalorder %s27, 0
      %p300 = por %p298, %p299
      %p301 = scmp.ne.s32.totalorder %s289, %s290
      %p302 = scmp.eq.s32.totalorder %s28, 1
      %p303 = por %p301, %p302
      %p305 = scmp.ne.s32.totalorder %s290, %s304
      %p306 = scmp.eq.s32.totalorder %s28, 0
      %p307 = por %p305, %p306
      %s308 = ssub.s32 %s22, %s29
      %p309 = scmp.eq.s32.totalorder %s308, 0
      %s311 = sadd.s32 %s310, 1
      %s312 = scalar_select %p309, %s310, %s311
      %p315 = pneg %p309
      %p316 = scmp.eq.s32.totalorder %s22, 1
      %p317 = por %p315, %p316
      %p318 = scmp.ne.s32.totalorder %s310, %s313
      %p319 = scmp.eq.s32.totalorder %s22, 0
      %p320 = por %p318, %p319
      %p321 = scmp.ne.s32.totalorder %s310, %s313
      %p322 = scmp.eq.s32.totalorder %s27, 1
      %p323 = por %p321, %p322
      %p324 = scmp.ne.s32.totalorder %s313, %s314
      %p325 = scmp.eq.s32.totalorder %s27, 0
      %p326 = por %p324, %p325
      %p327 = scmp.ne.s32.totalorder %s313, %s314
      %p328 = scmp.eq.s32.totalorder %s28, 1
      %p329 = por %p327, %p328
      %p331 = scmp.ne.s32.totalorder %s314, %s330
      %p332 = scmp.eq.s32.totalorder %s28, 0
      %p333 = por %p331, %p332
      %p334 = scmp.le.s32.totalorder 1, %s22
      %p335 = scmp.lt.s32.totalorder %s22, 3
      %p336 = pnand %p334, %p335
      %p337 = pneg %p336
      // Predicated region
      $region9: #{tpu_custom_call.1} parent=5 // pred_check
        _
      $region10: #{tpu_custom_call.1} parent=5 // pred_check_branch
        %339 = sbr.rel (%p336) target = $region12
      $region11: #{tpu_custom_call.1} parent=5 // pred_region
        %s340 = ssub.s32 %s22, 1
        // Predicated region
        $region13: #{tpu_custom_call.1} parent=11 // pred_check
          %p341 = pneg %p69
        $region14: #{tpu_custom_call.1} parent=11 // pred_check_branch
          %343 = sbr.rel (%p341) target = $region16
        $region15: #{tpu_custom_call.1} parent=11 // pred_region
          _
        $region16: #{tpu_custom_call.1} parent=11 // pred_fallthru
          _
        // Predicated region
        $region17: #{tpu_custom_call.1} parent=11 // pred_check
          %p344 = pneg %p90
        $region18: #{tpu_custom_call.1} parent=11 // pred_check_branch
          %346 = sbr.rel (%p344) target = $region20
        $region19: #{tpu_custom_call.1} parent=11 // pred_region
          _
        $region20: #{tpu_custom_call.1} parent=11 // pred_fallthru
          _
        // Predicated region
        $region21: #{tpu_custom_call.1} parent=11 // pred_check
          %p347 = pneg %p111
        $region22: #{tpu_custom_call.1} parent=11 // pred_check_branch
          %349 = sbr.rel (%p347) target = $region24
        $region23: #{tpu_custom_call.1} parent=11 // pred_region
          _
        $region24: #{tpu_custom_call.1} parent=11 // pred_fallthru
          _
        // Predicated region
        $region25: #{tpu_custom_call.1} parent=11 // pred_check
          %p350 = pneg %p132
        $region26: #{tpu_custom_call.1} parent=11 // pred_check_branch
          %352 = sbr.rel (%p350) target = $region28
        $region27: #{tpu_custom_call.1} parent=11 // pred_region
          _
        $region28: #{tpu_custom_call.1} parent=11 // pred_fallthru
          _
        // Predicated region
        $region29: #{tpu_custom_call.1} parent=11 // pred_check
          %p353 = pneg %p153
        $region30: #{tpu_custom_call.1} parent=11 // pred_check_branch
          %355 = sbr.rel (%p353) target = $region32
        $region31: #{tpu_custom_call.1} parent=11 // pred_region
          _
        $region32: #{tpu_custom_call.1} parent=11 // pred_fallthru
          _
        // Predicated region
        $region33: #{tpu_custom_call.1} parent=11 // pred_check
          %p356 = pneg %p174
        $region34: #{tpu_custom_call.1} parent=11 // pred_check_branch
          %358 = sbr.rel (%p356) target = $region36
        $region35: #{tpu_custom_call.1} parent=11 // pred_region
          _
        $region36: #{tpu_custom_call.1} parent=11 // pred_fallthru
          _
        // Predicated region
        $region37: #{tpu_custom_call.1} parent=11 // pred_check
          %p359 = pneg %p195
        $region38: #{tpu_custom_call.1} parent=11 // pred_check_branch
          %361 = sbr.rel (%p359) target = $region40
        $region39: #{tpu_custom_call.1} parent=11 // pred_region
          _
        $region40: #{tpu_custom_call.1} parent=11 // pred_fallthru
          _
        // Predicated region
        $region41: #{tpu_custom_call.1} parent=11 // pred_check
          %p362 = pneg %p216
        $region42: #{tpu_custom_call.1} parent=11 // pred_check_branch
          %364 = sbr.rel (%p362) target = $region44
        $region43: #{tpu_custom_call.1} parent=11 // pred_region
          _
        $region44: #{tpu_custom_call.1} parent=11 // pred_fallthru
          _
        // Predicated region
        $region45: #{tpu_custom_call.1} parent=11 // pred_check
          %p365 = pneg %p237
        $region46: #{tpu_custom_call.1} parent=11 // pred_check_branch
          %367 = sbr.rel (%p365) target = $region48
        $region47: #{tpu_custom_call.1} parent=11 // pred_region
          _
        $region48: #{tpu_custom_call.1} parent=11 // pred_fallthru
          _
        // Predicated region
        $region49: #{tpu_custom_call.1} parent=11 // pred_check
          %p368 = pneg %p258
        $region50: #{tpu_custom_call.1} parent=11 // pred_check_branch
          %370 = sbr.rel (%p368) target = $region52
        $region51: #{tpu_custom_call.1} parent=11 // pred_region
          _
        $region52: #{tpu_custom_call.1} parent=11 // pred_fallthru
          _
        // Predicated region
        $region53: #{tpu_custom_call.1} parent=11 // pred_check
          %p371 = pneg %p279
        $region54: #{tpu_custom_call.1} parent=11 // pred_check_branch
          %373 = sbr.rel (%p371) target = $region56
        $region55: #{tpu_custom_call.1} parent=11 // pred_region
          _
        $region56: #{tpu_custom_call.1} parent=11 // pred_fallthru
          _
        // Predicated region
        $region57: #{tpu_custom_call.1} parent=11 // pred_check
          %p374 = pneg %p300
        $region58: #{tpu_custom_call.1} parent=11 // pred_check_branch
          %376 = sbr.rel (%p374) target = $region60
        $region59: #{tpu_custom_call.1} parent=11 // pred_region
          _
        $region60: #{tpu_custom_call.1} parent=11 // pred_fallthru
          _
      $region12: #{tpu_custom_call.1} parent=5 // pred_fallthru
        _
      %p377 = scmp.lt.s32.totalorder %s22, 2
      // Predicated region
      $region61: #{tpu_custom_call.1} parent=5 // pred_check
        %p378 = pneg %p377
      $region62: #{tpu_custom_call.1} parent=5 // pred_check_branch
        %380 = sbr.rel (%p378) target = $region64
      $region63: #{tpu_custom_call.1} parent=5 // pred_region
        // Predicated region
        $region65: #{tpu_custom_call.1} parent=63 // pred_check
          %p381 = pneg %p42
        $region66: #{tpu_custom_call.1} parent=63 // pred_check_branch
          %383 = sbr.rel (%p381) target = $region68
        $region67: #{tpu_custom_call.1} parent=63 // pred_region
          %p384 = scmp.lt.s32.totalorder %s22, 1
          %s385 = scalar_select %p384, %s22, 1
          %s386 = smul.addr %s385, 8
          %s387 = scalar_lea.vmem %s0, %s386
        $region68: #{tpu_custom_call.1} parent=63 // pred_fallthru
          _
      $region64: #{tpu_custom_call.1} parent=5 // pred_fallthru
        _
      %p388 = scmp.le.s32.totalorder 1, %s22
      %p389 = scmp.lt.s32.totalorder %s22, 3
      %p390 = pnand %p388, %p389
      %p391 = pneg %p390
      // Predicated region
      $region69: #{tpu_custom_call.1} parent=5 // pred_check
        _
      $region70: #{tpu_custom_call.1} parent=5 // pred_check_branch
        %393 = sbr.rel (%p390) target = $region72
      $region71: #{tpu_custom_call.1} parent=5 // pred_region
        %s394 = ssub.s32 %s22, 1
        %p395 = scmp.lt.s32.totalorder %s27, 1
        %s396 = scalar_select %p395, %s27, 1
        %s397 = smul.addr %s396, 8
        %s398 = scalar_lea.vmem %s0, %s397
        %p399 = pneg %p48
        %p400 = pneg %p45
        %p401 = pneg %p69
        %p402 = pneg %p66
        %p403 = pneg %p90
        %p404 = pneg %p87
        %p405 = pneg %p111
        %p406 = pneg %p108
        %p407 = pneg %p132
        %p408 = pneg %p129
        %p409 = pneg %p153
        %p410 = pneg %p150
        %p411 = pneg %p174
        %p412 = pneg %p171
        %p413 = pneg %p195
        %p414 = pneg %p192
        %p415 = pneg %p216
        %p416 = pneg %p213
        %p417 = pneg %p237
        %p418 = pneg %p234
        %p419 = pneg %p258
        %p420 = pneg %p255
        %p421 = pneg %p279
        %p422 = pneg %p276
        %p423 = pneg %p300
        %p424 = pneg %p297
        %p425 = pneg %p326
        %p426 = pneg %p323
        %s427 = sand.u32 %s313, 1
        %s428 = scalar_lea.sflag [#allocation5], %s427
        %s429 = sand.u32 %s313, 1
        %s430 = smul.addr %s429, 8
        %s431 = scalar_lea.vmem [#allocation4], %s430
        %p432 = scmp.lt.s32.totalorder %s27, 1
        %s433 = scalar_select %p432, %s27, 1
        %s434 = smul.addr %s433, 8
        %s435 = scalar_lea.vmem %s0, %s434
        %v437 = vld [vmem:[%s435] sm:$0xff]
        %vm438 = vcmask 261120
        %v439 = vsel %vm438, %v437, 0.0
        %440 = vadd.xlane.f32.xlu0 %v439
        %v441 = vpop.xlane.xlu0 %440
        %v442 = vrcp.pop 32.0
        %v443 = vmul.f32 32.0, %v442
        %v444 = vsub.f32 1.0, %v443
        %v445 = vmul.f32 %v442, %v444
        %v446 = vadd.f32 %v442, %v445
        %vm447 = vweird.f32 %v442
        %v448 = vsel %vm447, %v442, %v446
        %v449 = vmul.f32 %v441, %v448
        %v450 = vsub.f32 %v437, %v449
        %v451 = vmul.f32 %v450, %v450
        %v452 = vsel %vm438, %v451, 0.0
        %453 = vadd.xlane.f32.xlu0 %v452
        %v454 = vpop.xlane.xlu0 %453
        %v455 = vmul.f32 %v454, %v448
        %v456 = vadd.f32 %v455, 1e-05
        %v457 = vrsqrt.pop %v456
        %v458 = vmul.f32 %v457, %v456
        %v459 = vmul.f32 %v458, %v457
        %v460 = vmul.f32 0.5, %v459
        %v461 = vsub.f32 1.5, %v460
        %v462 = vmul.f32 %v457, %v461
        %vm463 = vweird.f32 %v456
        %vm464 = vweird.f32 %v457
        %vm465 = vmor %vm463, %vm464
        %v466 = vsel %vm465, %v457, %v462
        %v467 = vmul.f32 %v450, %v466
        %v468 = vld [vmem:[%s1] sm:$0x1]
        %v470 = vperm.slane %v468, 0
        %v472 = vmul.f32 %v467, %v470
        %v473 = vld [vmem:[%s2] sm:$0x1]
        %v475 = vperm.slane %v473, 0
        %v477 = vadd.f32 %v472, %v475
        %v478 = vpack.c.bf16 %v477, %v477
        %v479 = vld [vmem:[%s3] sm:$0xf]
        %v480 = vld [vmem:[%s3 + $0x4] sm:$0xf]
        %v481 = vld [vmem:[%s3 + $0x8] sm:$0xf]
        %v482 = vld [vmem:[%s3 + $0xc] sm:$0xf]
        %v483 = vld [vmem:[%s4] sm:$0x1]
        %v485 = vperm.slane %v483, 0
        %v491 = vunpack.c.l.b16 %v479
        %v492 = vunpack.c.l.b16 %v480
        %v493 = vunpack.c.l.b16 %v481
        %v494 = vunpack.c.l.b16 %v482
        %v495 = vpack.c.b16 %v492, %v491
        %v496 = vpack.c.b16 %v494, %v493
        %v500 = vsel %vm438, %v478, 0
        %502 = vmatpush.bf16.msra.mxu0 0
        %503 = vmatpush.bf16.msra.mxu0 0
        %504 = vmatpush.bf16.msra.mxu0 0
        %505 = vmatpush.bf16.msra.mxu0 0
        %506 = vmatpush.bf16.msra.mxu0 0
        %507 = vmatpush.bf16.msra.mxu0 0
        %508 = vmatpush.bf16.msra.mxu0 %v496
        %509 = vmatpush.bf16.msra.mxu0 %v495
        %510 = vmatmul.bf16.gmra.mxu0 %v500
        %v511 = vpop.f32.mrf.mxu0
        %v512 = vadd.f32 %v485, %v511
        %v513 = vpop.f32.mrf.mxu0
        %514 = vdwg.mxu0
        %v515 = vpack.c.bf16 %v512, %v512
        %vm516 = vcmask 781312
        %517 = vst.msk [vmem:[#allocation2] sm:$0xf] %vm516, %v515
        %v518 = vlaneseq
        %v519 = vshrl.u32 %v518, 7
        %v520 = vlaneseq
        %v521 = vand.u32 %v520, 127
        %vm522 = vcmp.gt.s32.totalorder %v521, %v519
        %v523 = vld [vmem:[#allocation2] sm:$0xf]
        %v525 = vunpack.c.l.b16 %v523
        %v526 = vpack.c.b16 %v525, %v525
        %527 = vrot.lane.b32.xlu0 %v526, 96
        %v528 = vpop.permute.xlu0 %527
        %vm529 = vcmask 64512
        %v531 = vsel %vm529, %v523, 0
        %v534 = vsel %vm529, %v528, 0
        %536 = vmatpush.bf16.xpose.msra.mxu0 0
        %537 = vmatpush.bf16.xpose.msra.mxu0 0
        %538 = vmatpush.bf16.xpose.msra.mxu0 0
        %539 = vmatpush.bf16.xpose.msra.mxu0 0
        %540 = vmatpush.bf16.xpose.msra.mxu0 0
        %541 = vmatpush.bf16.xpose.msra.mxu0 0
        %542 = vmatpush.bf16.xpose.msra.mxu0 0
        %543 = vmatpush.bf16.xpose.msra.mxu0 %v534
        %544 = vmatmul.bf16.gmra.mxu0 %v531
        %v545 = vpop.f32.mrf.mxu0
        %v546 = vadd.f32 0.0, %v545
        %v547 = vpop.f32.mrf.mxu0
        %548 = vdwg.mxu0
        %v549 = vsel %vm522, -inf, %v546
        %v550 = vsel %vm529, %v549, -inf
        %551 = vmax.xlane.f32.xlu0 %v550
        %v552 = vpop.xlane.xlu0 %551
        %v553 = vsub.f32 %v549, %v552
        %v554 = vmul.f32 %v553, 1.442695
        %v555 = vpow.pop %v554
        %v556 = vsel %vm529, %v555, 0.0
        %557 = vadd.xlane.f32.xlu0 %v556
        %v558 = vpop.xlane.xlu0 %557
        %v559 = vrcp.pop %v558
        %v560 = vmul.f32 %v555, %v559
        %v561 = vpack.c.bf16 %v560, %v560
        %562 = vrot.lane.b32.xlu0 %v526, 64
        %v563 = vpop.permute.xlu0 %562
        %v565 = vsel %vm529, %v561, 0
        %vm567 = vcmask 1043456
        %v569 = vsel %vm567, %v563, 0
        %571 = vmatpush.bf16.msra.mxu0 0
        %572 = vmatpush.bf16.msra.mxu0 0
        %573 = vmatpush.bf16.msra.mxu0 0
        %574 = vmatpush.bf16.msra.mxu0 0
        %575 = vmatpush.bf16.msra.mxu0 0
        %576 = vmatpush.bf16.msra.mxu0 0
        %577 = vmatpush.bf16.msra.mxu0 0
        %578 = vmatpush.bf16.msra.mxu0 %v569
        %579 = vmatmul.bf16.gmra.mxu0 %v565
        %v580 = vpop.f32.mrf.mxu0
        %v581 = vadd.f32 0.0, %v580
        %v582 = vpop.f32.mrf.mxu0
        %583 = vdwg.mxu0
        %584 = vrot.lane.b32.xlu0 %v526, 120
        %v585 = vpop.permute.xlu0 %584
        %586 = vrot.lane.b32.xlu0 %v526, 88
        %v587 = vpop.permute.xlu0 %586
        %v589 = vsel %vm529, %v585, 0
        %v592 = vsel %vm529, %v587, 0
        %594 = vmatpush.bf16.xpose.msra.mxu0 0
        %595 = vmatpush.bf16.xpose.msra.mxu0 0
        %596 = vmatpush.bf16.xpose.msra.mxu0 0
        %597 = vmatpush.bf16.xpose.msra.mxu0 0
        %598 = vmatpush.bf16.xpose.msra.mxu0 0
        %599 = vmatpush.bf16.xpose.msra.mxu0 0
        %600 = vmatpush.bf16.xpose.msra.mxu0 0
        %601 = vmatpush.bf16.xpose.msra.mxu0 %v592
        %602 = vmatmul.bf16.gmra.mxu0 %v589
        %v603 = vpop.f32.mrf.mxu0
        %v604 = vadd.f32 0.0, %v603
        %v605 = vpop.f32.mrf.mxu0
        %606 = vdwg.mxu0
        %v607 = vsel %vm522, -inf, %v604
        %v608 = vsel %vm529, %v607, -inf
        %609 = vmax.xlane.f32.xlu0 %v608
        %v610 = vpop.xlane.xlu0 %609
        %v611 = vsub.f32 %v607, %v610
        %v612 = vmul.f32 %v611, 1.442695
        %v613 = vpow.pop %v612
        %v614 = vsel %vm529, %v613, 0.0
        %615 = vadd.xlane.f32.xlu0 %v614
        %v616 = vpop.xlane.xlu0 %615
        %v617 = vrcp.pop %v616
        %v618 = vmul.f32 %v613, %v617
        %v619 = vpack.c.bf16 %v618, %v618
        %620 = vrot.lane.b32.xlu0 %v526, 56
        %v621 = vpop.permute.xlu0 %620
        %v623 = vsel %vm529, %v619, 0
        %v626 = vsel %vm567, %v621, 0
        %628 = vmatpush.bf16.msra.mxu0 0
        %629 = vmatpush.bf16.msra.mxu0 0
        %630 = vmatpush.bf16.msra.mxu0 0
        %631 = vmatpush.bf16.msra.mxu0 0
        %632 = vmatpush.bf16.msra.mxu0 0
        %633 = vmatpush.bf16.msra.mxu0 0
        %634 = vmatpush.bf16.msra.mxu0 0
        %635 = vmatpush.bf16.msra.mxu0 %v626
        %636 = vmatmul.bf16.gmra.mxu0 %v623
        %v637 = vpop.f32.mrf.mxu0
        %v638 = vadd.f32 0.0, %v637
        %v639 = vpop.f32.mrf.mxu0
        %640 = vdwg.mxu0
        %642 = vrot.lane.b32.xlu0 %v638, 8
        %v643 = vpop.permute.xlu0 %642
        %v645 = vsel %vm529, %v581, %v643
        %v646 = vpack.c.bf16 %v645, %v645
        %vm647 = vcmask 125952
        %648 = vst.msk [vmem:[#allocation3] sm:$0xf] %vm647, %v646
        %v649 = vld [vmem:[#allocation2] sm:$0xf]
        %v651 = vunpack.c.l.b16 %v649
        %v652 = vpack.c.b16 %v651, %v651
        %653 = vrot.lane.b32.xlu0 %v652, 112
        %v654 = vpop.permute.xlu0 %653
        %655 = vrot.lane.b32.xlu0 %v652, 80
        %v656 = vpop.permute.xlu0 %655
        %v658 = vsel %vm529, %v654, 0
        %v661 = vsel %vm529, %v656, 0
        %663 = vmatpush.bf16.xpose.msra.mxu0 0
        %664 = vmatpush.bf16.xpose.msra.mxu0 0
        %665 = vmatpush.bf16.xpose.msra.mxu0 0
        %666 = vmatpush.bf16.xpose.msra.mxu0 0
        %667 = vmatpush.bf16.xpose.msra.mxu0 0
        %668 = vmatpush.bf16.xpose.msra.mxu0 0
        %669 = vmatpush.bf16.xpose.msra.mxu0 0
        %670 = vmatpush.bf16.xpose.msra.mxu0 %v661
        %671 = vmatmul.bf16.gmra.mxu0 %v658
        %v672 = vpop.f32.mrf.mxu0
        %v673 = vadd.f32 0.0, %v672
        %v674 = vpop.f32.mrf.mxu0
        %675 = vdwg.mxu0
        %v676 = vsel %vm522, -inf, %v673
        %v677 = vsel %vm529, %v676, -inf
        %678 = vmax.xlane.f32.xlu0 %v677
        %v679 = vpop.xlane.xlu0 %678
        %v680 = vsub.f32 %v676, %v679
        %v681 = vmul.f32 %v680, 1.442695
        %v682 = vpow.pop %v681
        %v683 = vsel %vm529, %v682, 0.0
        %684 = vadd.xlane.f32.xlu0 %v683
        %v685 = vpop.xlane.xlu0 %684
        %v686 = vrcp.pop %v685
        %v687 = vmul.f32 %v682, %v686
        %v688 = vpack.c.bf16 %v687, %v687
        %689 = vrot.lane.b32.xlu0 %v652, 48
        %v690 = vpop.permute.xlu0 %689
        %v692 = vsel %vm529, %v688, 0
        %v695 = vsel %vm567, %v690, 0
        %697 = vmatpush.bf16.msra.mxu0 0
        %698 = vmatpush.bf16.msra.mxu0 0
        %699 = vmatpush.bf16.msra.mxu0 0
        %700 = vmatpush.bf16.msra.mxu0 0
        %701 = vmatpush.bf16.msra.mxu0 0
        %702 = vmatpush.bf16.msra.mxu0 0
        %703 = vmatpush.bf16.msra.mxu0 0
        %704 = vmatpush.bf16.msra.mxu0 %v695
        %705 = vmatmul.bf16.gmra.mxu0 %v692
        %v706 = vpop.f32.mrf.mxu0
        %v707 = vadd.f32 0.0, %v706
        %v708 = vpop.f32.mrf.mxu0
        %709 = vdwg.mxu0
        %710 = vrot.lane.b32.xlu0 %v652, 104
        %v711 = vpop.permute.xlu0 %710
        %712 = vrot.lane.b32.xlu0 %v652, 72
        %v713 = vpop.permute.xlu0 %712
        %v715 = vsel %vm529, %v711, 0
        %v718 = vsel %vm529, %v713, 0
        %720 = vmatpush.bf16.xpose.msra.mxu0 0
        %721 = vmatpush.bf16.xpose.msra.mxu0 0
        %722 = vmatpush.bf16.xpose.msra.mxu0 0
        %723 = vmatpush.bf16.xpose.msra.mxu0 0
        %724 = vmatpush.bf16.xpose.msra.mxu0 0
        %725 = vmatpush.bf16.xpose.msra.mxu0 0
        %726 = vmatpush.bf16.xpose.msra.mxu0 0
        %727 = vmatpush.bf16.xpose.msra.mxu0 %v718
        %728 = vmatmul.bf16.gmra.mxu0 %v715
        %v729 = vpop.f32.mrf.mxu0
        %v730 = vadd.f32 0.0, %v729
        %v731 = vpop.f32.mrf.mxu0
        %732 = vdwg.mxu0
        %v733 = vsel %vm522, -inf, %v730
        %v734 = vsel %vm529, %v733, -inf
        %735 = vmax.xlane.f32.xlu0 %v734
        %v736 = vpop.xlane.xlu0 %735
        %v737 = vsub.f32 %v733, %v736
        %v738 = vmul.f32 %v737, 1.442695
        %v739 = vpow.pop %v738
        %v740 = vsel %vm529, %v739, 0.0
        %741 = vadd.xlane.f32.xlu0 %v740
        %v742 = vpop.xlane.xlu0 %741
        %v743 = vrcp.pop %v742
        %v744 = vmul.f32 %v739, %v743
        %v745 = vpack.c.bf16 %v744, %v744
        %746 = vrot.lane.b32.xlu0 %v652, 40
        %v747 = vpop.permute.xlu0 %746
        %v749 = vsel %vm529, %v745, 0
        %v752 = vsel %vm567, %v747, 0
        %754 = vmatpush.bf16.msra.mxu0 0
        %755 = vmatpush.bf16.msra.mxu0 0
        %756 = vmatpush.bf16.msra.mxu0 0
        %757 = vmatpush.bf16.msra.mxu0 0
        %758 = vmatpush.bf16.msra.mxu0 0
        %759 = vmatpush.bf16.msra.mxu0 0
        %760 = vmatpush.bf16.msra.mxu0 0
        %761 = vmatpush.bf16.msra.mxu0 %v752
        %762 = vmatmul.bf16.gmra.mxu0 %v749
        %v763 = vpop.f32.mrf.mxu0
        %v764 = vadd.f32 0.0, %v763
        %v765 = vpop.f32.mrf.mxu0
        %766 = vdwg.mxu0
        %768 = vrot.lane.b32.xlu0 %v764, 8
        %v769 = vpop.permute.xlu0 %768
        %v771 = vsel %vm529, %v707, %v769
        %v772 = vpack.c.bf16 %v771, %v771
        %774 = vrot.lane.b32.xlu0 %v772, 16
        %v775 = vpop.permute.xlu0 %774
        %vm777 = vcmask 257152
        %778 = vst.msk [vmem:[#allocation3] sm:$0xf] %vm777, %v775
        %v779 = vld [vmem:[#allocation3] sm:$0xf]
        %v780 = vld [vmem:[%s5] sm:$0xf]
        %v781 = vld [vmem:[%s5 + $0x4] sm:$0xf]
        %v782 = vld [vmem:[%s5 + $0x8] sm:$0xf]
        %v783 = vld [vmem:[%s5 + $0xc] sm:$0xf]
        %v784 = vld [vmem:[%s6] sm:$0x1]
        %v786 = vperm.slane %v784, 0
        %v792 = vunpack.c.l.b16 %v780
        %v793 = vunpack.c.l.b16 %v781
        %v794 = vunpack.c.l.b16 %v782
        %v795 = vunpack.c.l.b16 %v783
        %v796 = vpack.c.b16 %v793, %v792
        %v797 = vpack.c.b16 %v795, %v794
        %v801 = vsel %vm438, %v779, 0
        %803 = vmatpush.bf16.msra.mxu0 0
        %804 = vmatpush.bf16.msra.mxu0 0
        %805 = vmatpush.bf16.msra.mxu0 0
        %806 = vmatpush.bf16.msra.mxu0 0
        %807 = vmatpush.bf16.msra.mxu0 0
        %808 = vmatpush.bf16.msra.mxu0 0
        %809 = vmatpush.bf16.msra.mxu0 %v797
        %810 = vmatpush.bf16.msra.mxu0 %v796
        %811 = vmatmul.bf16.gmra.mxu0 %v801
        %v812 = vpop.f32.mrf.mxu0
        %v813 = vadd.f32 %v786, %v812
        %v814 = vpop.f32.mrf.mxu0
        %815 = vdwg.mxu0
        %v816 = vadd.f32 %v813, %v437
        %v817 = vsel %vm438, %v816, 0.0
        %818 = vadd.xlane.f32.xlu0 %v817
        %v819 = vpop.xlane.xlu0 %818
        %v820 = vmul.f32 %v819, %v448
        %v821 = vsub.f32 %v816, %v820
        %v822 = vmul.f32 %v821, %v821
        %v823 = vsel %vm438, %v822, 0.0
        %824 = vadd.xlane.f32.xlu0 %v823
        %v825 = vpop.xlane.xlu0 %824
        %v826 = vmul.f32 %v825, %v448
        %v827 = vadd.f32 %v826, 1e-05
        %v828 = vrsqrt.pop %v827
        %v829 = vmul.f32 %v828, %v827
        %v830 = vmul.f32 %v829, %v828
        %v831 = vmul.f32 0.5, %v830
        %v832 = vsub.f32 1.5, %v831
        %v833 = vmul.f32 %v828, %v832
        %vm834 = vweird.f32 %v827
        %vm835 = vweird.f32 %v828
        %vm836 = vmor %vm834, %vm835
        %v837 = vsel %vm836, %v828, %v833
        %v838 = vmul.f32 %v821, %v837
        %v839 = vld [vmem:[%s7] sm:$0x1]
        %v841 = vperm.slane %v839, 0
        %v843 = vmul.f32 %v838, %v841
        %v844 = vld [vmem:[%s8] sm:$0x1]
        %v846 = vperm.slane %v844, 0
        %v848 = vadd.f32 %v843, %v846
        %v849 = vpack.c.bf16 %v848, %v848
        %v850 = vld [vmem:[%s9] sm:$0xf]
        %v851 = vld [vmem:[%s9 + $0x4] sm:$0xf]
        %v852 = vld [vmem:[%s9 + $0x8] sm:$0xf]
        %v853 = vld [vmem:[%s9 + $0xc] sm:$0xf]
        %v854 = vld [vmem:[%s10] sm:$0x1]
        %v856 = vperm.slane %v854, 0
        %v862 = vunpack.c.l.b16 %v850
        %v863 = vunpack.c.l.b16 %v851
        %v864 = vunpack.c.l.b16 %v852
        %v865 = vunpack.c.l.b16 %v853
        %v866 = vpack.c.b16 %v863, %v862
        %v867 = vpack.c.b16 %v865, %v864
        %v871 = vsel %vm438, %v849, 0
        %873 = vmatpush.bf16.msra.mxu0 0
        %874 = vmatpush.bf16.msra.mxu0 0
        %875 = vmatpush.bf16.msra.mxu0 0
        %876 = vmatpush.bf16.msra.mxu0 0
        %877 = vmatpush.bf16.msra.mxu0 0
        %878 = vmatpush.bf16.msra.mxu0 0
        %879 = vmatpush.bf16.msra.mxu0 %v867
        %880 = vmatpush.bf16.msra.mxu0 %v866
        %881 = vmatmul.bf16.gmra.mxu0 %v871
        %v882 = vpop.f32.mrf.mxu0
        %v883 = vadd.f32 %v856, %v882
        %v884 = vpop.f32.mrf.mxu0
        %885 = vdwg.mxu0
        %v886 = vmul.f32 %v883, 1.702
        %v887 = vxor.u32 %v886, 2147483648
        %v888 = vmul.f32 %v887, 1.442695
        %v889 = vpow.pop %v888
        %v890 = vadd.f32 %v889, 1.0
        %v891 = vrcp.pop %v890
        %v892 = vmul.f32 %v890, %v891
        %v893 = vsub.f32 1.0, %v892
        %v894 = vmul.f32 %v891, %v893
        %v895 = vadd.f32 %v891, %v894
        %vm896 = vweird.f32 %v890
        %vm897 = vweird.f32 %v891
        %vm898 = vmor %vm896, %vm897
        %v899 = vsel %vm898, %v891, %v895
        %v900 = vand.u32 2147483647, %v890
        %vm901 = vcmp.eq.f32.partialorder %v900, 8.507059e+37
        %v902 = vand.u32 %v890, 2147483648
        %v903 = vor.u32 1.1754944e-38, %v902
        %v904 = vsel %vm901, %v903, %v899
        %v905 = vmul.f32 1.0, %v904
        %v906 = vmul.f32 %v883, %v905
        %v907 = vpack.c.bf16 %v906, %v906
        %v908 = vld [vmem:[%s11] sm:$0xf]
        %v909 = vld [vmem:[%s11 + $0x4] sm:$0xf]
        %v910 = vld [vmem:[%s11 + $0x8] sm:$0xf]
        %v911 = vld [vmem:[%s11 + $0xc] sm:$0xf]
        %v912 = vld [vmem:[%s11 + $0x10] sm:$0xf]
        %v913 = vld [vmem:[%s11 + $0x14] sm:$0xf]
        %v914 = vld [vmem:[%s11 + $0x18] sm:$0xf]
        %v915 = vld [vmem:[%s11 + $0x1c] sm:$0xf]
        %v916 = vld [vmem:[%s11 + $0x20] sm:$0xf]
        %v917 = vld [vmem:[%s11 + $0x24] sm:$0xf]
        %v918 = vld [vmem:[%s11 + $0x28] sm:$0xf]
        %v919 = vld [vmem:[%s11 + $0x2c] sm:$0xf]
        %v920 = vld [vmem:[%s11 + $0x30] sm:$0xf]
        %v921 = vld [vmem:[%s11 + $0x34] sm:$0xf]
        %v922 = vld [vmem:[%s11 + $0x38] sm:$0xf]
        %v923 = vld [vmem:[%s11 + $0x3c] sm:$0xf]
        %v924 = vld [vmem:[%s12] sm:$0x1]
        %v926 = vperm.slane %v924, 0
        %v944 = vunpack.c.l.b16 %v908
        %v945 = vunpack.c.l.b16 %v909
        %v946 = vunpack.c.l.b16 %v910
        %v947 = vunpack.c.l.b16 %v911
        %v948 = vunpack.c.l.b16 %v912
        %v949 = vunpack.c.l.b16 %v913
        %v950 = vunpack.c.l.b16 %v914
        %v951 = vunpack.c.l.b16 %v915
        %v952 = vunpack.c.l.b16 %v916
        %v953 = vunpack.c.l.b16 %v917
        %v954 = vunpack.c.l.b16 %v918
        %v955 = vunpack.c.l.b16 %v919
        %v956 = vunpack.c.l.b16 %v920
        %v957 = vunpack.c.l.b16 %v921
        %v958 = vunpack.c.l.b16 %v922
        %v959 = vunpack.c.l.b16 %v923
        %v960 = vpack.c.b16 %v945, %v944
        %v961 = vpack.c.b16 %v947, %v946
        %v962 = vpack.c.b16 %v949, %v948
        %v963 = vpack.c.b16 %v951, %v950
        %v964 = vpack.c.b16 %v953, %v952
        %v965 = vpack.c.b16 %v955, %v954
        %v966 = vpack.c.b16 %v957, %v956
        %v967 = vpack.c.b16 %v959, %v958
        %976 = vmatpush.bf16.msra.mxu0 %v967
        %977 = vmatpush.bf16.msra.mxu0 %v966
        %978 = vmatpush.bf16.msra.mxu0 %v965
        %979 = vmatpush.bf16.msra.mxu0 %v964
        %980 = vmatpush.bf16.msra.mxu0 %v963
        %981 = vmatpush.bf16.msra.mxu0 %v962
        %982 = vmatpush.bf16.msra.mxu0 %v961
        %983 = vmatpush.bf16.msra.mxu0 %v960
        %984 = vmatmul.bf16.gmra.mxu0 %v907
        %v985 = vpop.f32.mrf.mxu0
        %v986 = vadd.f32 %v926, %v985
        %v987 = vpop.f32.mrf.mxu0
        %988 = vdwg.mxu0
        %v989 = vadd.f32 %v986, %v816
        %990 = vst.msk [vmem:[%s431] sm:$0xff] %vm438, %v989
        %s991 = sand.u32 %s313, 1
        %s992 = scalar_lea.sflag [#allocation5], %s991
        %s993 = sand.u32 %s313, 1
        %s994 = smul.addr %s993, 8
        %s995 = scalar_lea.vmem [#allocation4], %s994
        // Predicated region
        $region73: #{tpu_custom_call.1} parent=71 // pred_check
          %p996 = pneg %p323
        $region74: #{tpu_custom_call.1} parent=71 // pred_check_branch
          %998 = sbr.rel (%p996) target = $region76
        $region75: #{tpu_custom_call.1} parent=71 // pred_region
          %1000 = vsyncadd %s992, 0
          %s1001 = smul.addr %s27, 8
          %s1002 = scalar_lea.hbm %s13, %s1001
          %s1004 = sshll.u32 %s995, 4
          %s1005 = int_to_ptr.vmem [resolvable:$true] %s1004
          %s1006 = sshll.u32 %s1002, 4
          %s1007 = int_to_ptr.hbm [resolvable:$true] %s1006
          %1009 = dma.vmem_to_hbm [thread:$0]  %s1005, 128, %s1007, %s992
        $region76: #{tpu_custom_call.1} parent=71 // pred_fallthru
          _
      $region72: #{tpu_custom_call.1} parent=5 // pred_fallthru
        _
      %p1010 = scmp.le.s32.totalorder 2, %s22
      // Predicated region
      $region77: #{tpu_custom_call.1} parent=5 // pred_check
        %p1011 = pneg %p1010
      $region78: #{tpu_custom_call.1} parent=5 // pred_check_branch
        %1013 = sbr.rel (%p1011) target = $region80
      $region79: #{tpu_custom_call.1} parent=5 // pred_region
        %s1014 = ssub.s32 %s22, 2
        // Predicated region
        $region81: #{tpu_custom_call.1} parent=79 // pred_check
          %p1015 = pneg %p329
        $region82: #{tpu_custom_call.1} parent=79 // pred_check_branch
          %1017 = sbr.rel (%p1015) target = $region84
        $region83: #{tpu_custom_call.1} parent=79 // pred_region
          %s1018 = sand.u32 %s314, 1
          %s1019 = scalar_lea.sflag [#allocation5], %s1018
          %s1020 = sand.u32 %s314, 1
          %s1021 = smul.addr %s1020, 8
          %s1022 = scalar_lea.vmem [#allocation4], %s1021
          %1024 = dma.done %s1019, 128
        $region84: #{tpu_custom_call.1} parent=79 // pred_fallthru
          _
      $region80: #{tpu_custom_call.1} parent=5 // pred_fallthru
        _
    $region6: #{tpu_custom_call.1} parent=1 // loop_footer
      %s26 = sadd.s32 1, %s22
    $region7: #{tpu_custom_call.1} parent=1 // loop_footer_branch
      %21 = sbr.rel target = $region3
    $region8: #{tpu_custom_call.1} parent=1 // loop_exit
      _
    %1025 = vsyncpa [#allocation5], 1
    %s1026 = scalar_lea.sflag [#allocation5], 1
    %1027 = vsyncpa %s1026, 1

// kernel: tpu_custom_call.1
$region0: #{tpu_custom_call.1}
  #allocation0 [shape = 'u32[]', space=smem, size = 0x4, offset = 0x4, fixed_abs, tag = 'smem constant byte address 0x4 - core index']
  #allocation1 [shape = 'u32[72,128]{1,0:T(1,128)}', space=vmem, size = 0x9000, scoped, tag = 'internal scratch']
  #allocation2 [shape = 'bf16[8,96]{1,0:T(8,128)(2,1)}', space=vmem, size = 0x800, scoped, tag = 'scratch operand']
  #allocation3 [shape = 'bf16[8,32]{1,0:T(8,128)(2,1)}', space=vmem, size = 0x800, scoped, tag = 'scratch operand']
  %s0 = inlined_call_operand.vmem [shape: f32[2,8,32], index: 0, kind: input, shape index: {}]
  %s1 = inlined_call_operand.vmem [shape: f32[1,32], index: 1, kind: input, shape index: {}]
  %s2 = inlined_call_operand.vmem [shape: f32[1,32], index: 2, kind: input, shape index: {}]
  %s3 = inlined_call_operand.vmem [shape: bf16[32,96], index: 3, kind: input, shape index: {}]
  %s4 = inlined_call_operand.vmem [shape: f32[1,96], index: 4, kind: input, shape index: {}]
  %s5 = inlined_call_operand.vmem [shape: bf16[32,32], index: 5, kind: input, shape index: {}]
  %s6 = inlined_call_operand.vmem [shape: f32[1,32], index: 6, kind: input, shape index: {}]
  %s7 = inlined_call_operand.vmem [shape: f32[1,32], index: 7, kind: input, shape index: {}]
  %s8 = inlined_call_operand.vmem [shape: f32[1,32], index: 8, kind: input, shape index: {}]
  %s9 = inlined_call_operand.vmem [shape: bf16[32,128], index: 9, kind: input, shape index: {}]
  %s10 = inlined_call_operand.vmem [shape: f32[1,128], index: 10, kind: input, shape index: {}]
  %s11 = inlined_call_operand.vmem [shape: bf16[128,32], index: 11, kind: input, shape index: {}]
  %s12 = inlined_call_operand.vmem [shape: f32[1,32], index: 12, kind: input, shape index: {}]
  %s13 = inlined_call_operand.hbm [shape: f32[2,8,32], index: 13, kind: output, shape index: {}]
  %s14 = sld [smem:[#allocation0]]
  $region85: #{tpu_custom_call.1} parent=0
    _
  %s16 = ssub.s32 1, %s14
  %s17 = scalar_select 0, %s16, %s14
  $region1: #{tpu_custom_call.1} parent=0
    #allocation4 [shape = 'u8[8192]{0}', space=vmem, size = 0x2000, scoped, tag = 'output window, operand 0']
    #allocation5 [shape = 's32[2]{0}', space=sflag, size = 0x8, scoped, tag = 'scoped memory for tpu_custom_call.1']
    %18 = vsyncpa [#allocation5], 0
    %s19 = scalar_lea.sflag [#allocation5], 1
    %20 = vsyncpa %s19, 0
    loop: start=0, step=1, limit=4
    $region2: #{tpu_custom_call.1} parent=1 // loop_pre_header
      _
    $region3: #{tpu_custom_call.1} parent=1 // loop_header
      %s22 = sphi 0, %s26
      %p23 = scmp.ge.s32.totalorder %s22, 4
      %s32 = sphi 0, %s34
      %s35 = sphi 0, %s32
      %s36 = sphi 0, %s35
      %s52 = sphi 0, %s36
      %s56 = sphi 0, %s56
      %s58 = sphi 0, %s56
      %s59 = sphi 0, %s58
      %s73 = sphi 0, %s59
      %s77 = sphi 0, %s77
      %s79 = sphi 0, %s77
      %s80 = sphi 0, %s79
      %s94 = sphi 0, %s80
      %s98 = sphi 0, %s98
      %s100 = sphi 0, %s98
      %s101 = sphi 0, %s100
      %s115 = sphi 0, %s101
      %s119 = sphi 0, %s119
      %s121 = sphi 0, %s119
      %s122 = sphi 0, %s121
      %s136 = sphi 0, %s122
      %s140 = sphi 0, %s140
      %s142 = sphi 0, %s140
      %s143 = sphi 0, %s142
      %s157 = sphi 0, %s143
      %s161 = sphi 0, %s161
      %s163 = sphi 0, %s161
      %s164 = sphi 0, %s163
      %s178 = sphi 0, %s164
      %s182 = sphi 0, %s182
      %s184 = sphi 0, %s182
      %s185 = sphi 0, %s184
      %s199 = sphi 0, %s185
      %s203 = sphi 0, %s203
      %s205 = sphi 0, %s203
      %s206 = sphi 0, %s205
      %s220 = sphi 0, %s206
      %s224 = sphi 0, %s224
      %s226 = sphi 0, %s224
      %s227 = sphi 0, %s226
      %s241 = sphi 0, %s227
      %s245 = sphi 0, %s245
      %s247 = sphi 0, %s245
      %s248 = sphi 0, %s247
      %s262 = sphi 0, %s248
      %s266 = sphi 0, %s266
      %s268 = sphi 0, %s266
      %s269 = sphi 0, %s268
      %s283 = sphi 0, %s269
      %s287 = sphi 0, %s287
      %s289 = sphi 0, %s287
      %s290 = sphi 0, %s289
      %s304 = sphi 0, %s290
      %s310 = sphi 0, %s312
      %s313 = sphi 0, %s310
      %s314 = sphi 0, %s313
      %s330 = sphi 0, %s314
    $region4: #{tpu_custom_call.1} parent=1 // loop_header_branch
      %25 = sbr.rel (%p23) target = $region8
    $region5: #{tpu_custom_call.1} parent=1 // loop_body
      %s27 = ssub.s32 %s22, 1
      %s28 = ssub.s32 %s22, 2
      %s29 = sadd.s32 %s22, 1
      %s30 = ssub.s32 %s22, %s29
      %p31 = scmp.eq.s32.totalorder %s30, 0
      %s33 = sadd.s32 %s32, 1
      %s34 = scalar_select %p31, %s32, %s33
      %p37 = pneg %p31
      %p38 = scmp.eq.s32.totalorder %s22, 1
      %p39 = por %p37, %p38
      %p40 = scmp.ne.s32.totalorder %s32, %s35
      %p41 = scmp.eq.s32.totalorder %s22, 0
      %p42 = por %p40, %p41
      %p43 = scmp.ne.s32.totalorder %s32, %s35
      %p44 = scmp.eq.s32.totalorder %s27, 1
      %p45 = por %p43, %p44
      %p46 = scmp.ne.s32.totalorder %s35, %s36
      %p47 = scmp.eq.s32.totalorder %s27, 0
      %p48 = por %p46, %p47
      %p49 = scmp.ne.s32.totalorder %s35, %s36
      %p50 = scmp.eq.s32.totalorder %s28, 1
      %p51 = por %p49, %p50
      %p53 = scmp.ne.s32.totalorder %s36, %s52
      %p54 = scmp.eq.s32.totalorder %s28, 0
      %p55 = por %p53, %p54
      %s57 = sadd.s32 %s56, 1
      %p60 = scmp.eq.s32.totalorder %s22, 1
      %p61 = scmp.ne.s32.totalorder %s56, %s58
      %p62 = scmp.eq.s32.totalorder %s22, 0
      %p63 = por %p61, %p62
      %p64 = scmp.ne.s32.totalorder %s56, %s58
      %p65 = scmp.eq.s32.totalorder %s27, 1
      %p66 = por %p64, %p65
      %p67 = scmp.ne.s32.totalorder %s58, %s59
      %p68 = scmp.eq.s32.totalorder %s27, 0
      %p69 = por %p67, %p68
      %p70 = scmp.ne.s32.totalorder %s58, %s59
      %p71 = scmp.eq.s32.totalorder %s28, 1
      %p72 = por %p70, %p71
      %p74 = scmp.ne.s32.totalorder %s59, %s73
      %p75 = scmp.eq.s32.totalorder %s28, 0
      %p76 = por %p74, %p75
      %s78 = sadd.s32 %s77, 1
      %p81 = scmp.eq.s32.totalorder %s22, 1
      %p82 = scmp.ne.s32.totalorder %s77, %s79
      %p83 = scmp.eq.s32.totalorder %s22, 0
      %p84 = por %p82, %p83
      %p85 = scmp.ne.s32.totalorder %s77, %s79
      %p86 = scmp.eq.s32.totalorder %s27, 1
      %p87 = por %p85, %p86
      %p88 = scmp.ne.s32.totalorder %s79, %s80
      %p89 = scmp.eq.s32.totalorder %s27, 0
      %p90 = por %p88, %p89
      %p91 = scmp.ne.s32.totalorder %s79, %s80
      %p92 = scmp.eq.s32.totalorder %s28, 1
      %p93 = por %p91, %p92
      %p95 = scmp.ne.s32.totalorder %s80, %s94
      %p96 = scmp.eq.s32.totalorder %s28, 0
      %p97 = por %p95, %p96
      %s99 = sadd.s32 %s98, 1
      %p102 = scmp.eq.s32.totalorder %s22, 1
      %p103 = scmp.ne.s32.totalorder %s98, %s100
      %p104 = scmp.eq.s32.totalorder %s22, 0
      %p105 = por %p103, %p104
      %p106 = scmp.ne.s32.totalorder %s98, %s100
      %p107 = scmp.eq.s32.totalorder %s27, 1
      %p108 = por %p106, %p107
      %p109 = scmp.ne.s32.totalorder %s100, %s101
      %p110 = scmp.eq.s32.totalorder %s27, 0
      %p111 = por %p109, %p110
      %p112 = scmp.ne.s32.totalorder %s100, %s101
      %p113 = scmp.eq.s32.totalorder %s28, 1
      %p114 = por %p112, %p113
      %p116 = scmp.ne.s32.totalorder %s101, %s115
      %p117 = scmp.eq.s32.totalorder %s28, 0
      %p118 = por %p116, %p117
      %s120 = sadd.s32 %s119, 1
      %p123 = scmp.eq.s32.totalorder %s22, 1
      %p124 = scmp.ne.s32.totalorder %s119, %s121
      %p125 = scmp.eq.s32.totalorder %s22, 0
      %p126 = por %p124, %p125
      %p127 = scmp.ne.s32.totalorder %s119, %s121
      %p128 = scmp.eq.s32.totalorder %s27, 1
      %p129 = por %p127, %p128
      %p130 = scmp.ne.s32.totalorder %s121, %s122
      %p131 = scmp.eq.s32.totalorder %s27, 0
      %p132 = por %p130, %p131
      %p133 = scmp.ne.s32.totalorder %s121, %s122
      %p134 = scmp.eq.s32.totalorder %s28, 1
      %p135 = por %p133, %p134
      %p137 = scmp.ne.s32.totalorder %s122, %s136
      %p138 = scmp.eq.s32.totalorder %s28, 0
      %p139 = por %p137, %p138
      %s141 = sadd.s32 %s140, 1
      %p144 = scmp.eq.s32.totalorder %s22, 1
      %p145 = scmp.ne.s32.totalorder %s140, %s142
      %p146 = scmp.eq.s32.totalorder %s22, 0
      %p147 = por %p145, %p146
      %p148 = scmp.ne.s32.totalorder %s140, %s142
      %p149 = scmp.eq.s32.totalorder %s27, 1
      %p150 = por %p148, %p149
      %p151 = scmp.ne.s32.totalorder %s142, %s143
      %p152 = scmp.eq.s32.totalorder %s27, 0
      %p153 = por %p151, %p152
      %p154 = scmp.ne.s32.totalorder %s142, %s143
      %p155 = scmp.eq.s32.totalorder %s28, 1
      %p156 = por %p154, %p155
      %p158 = scmp.ne.s32.totalorder %s143, %s157
      %p159 = scmp.eq.s32.totalorder %s28, 0
      %p160 = por %p158, %p159
      %s162 = sadd.s32 %s161, 1
      %p165 = scmp.eq.s32.totalorder %s22, 1
      %p166 = scmp.ne.s32.totalorder %s161, %s163
      %p167 = scmp.eq.s32.totalorder %s22, 0
      %p168 = por %p166, %p167
      %p169 = scmp.ne.s32.totalorder %s161, %s163
      %p170 = scmp.eq.s32.totalorder %s27, 1
      %p171 = por %p169, %p170
      %p172 = scmp.ne.s32.totalorder %s163, %s164
      %p173 = scmp.eq.s32.totalorder %s27, 0
      %p174 = por %p172, %p173
      %p175 = scmp.ne.s32.totalorder %s163, %s164
      %p176 = scmp.eq.s32.totalorder %s28, 1
      %p177 = por %p175, %p176
      %p179 = scmp.ne.s32.totalorder %s164, %s178
      %p180 = scmp.eq.s32.totalorder %s28, 0
      %p181 = por %p179, %p180
      %s183 = sadd.s32 %s182, 1
      %p186 = scmp.eq.s32.totalorder %s22, 1
      %p187 = scmp.ne.s32.totalorder %s182, %s184
      %p188 = scmp.eq.s32.totalorder %s22, 0
      %p189 = por %p187, %p188
      %p190 = scmp.ne.s32.totalorder %s182, %s184
      %p191 = scmp.eq.s32.totalorder %s27, 1
      %p192 = por %p190, %p191
      %p193 = scmp.ne.s32.totalorder %s184, %s185
      %p194 = scmp.eq.s32.totalorder %s27, 0
      %p195 = por %p193, %p194
      %p196 = scmp.ne.s32.totalorder %s184, %s185
      %p197 = scmp.eq.s32.totalorder %s28, 1
      %p198 = por %p196, %p197
      %p200 = scmp.ne.s32.totalorder %s185, %s199
      %p201 = scmp.eq.s32.totalorder %s28, 0
      %p202 = por %p200, %p201
      %s204 = sadd.s32 %s203, 1
      %p207 = scmp.eq.s32.totalorder %s22, 1
      %p208 = scmp.ne.s32.totalorder %s203, %s205
      %p209 = scmp.eq.s32.totalorder %s22, 0
      %p210 = por %p208, %p209
      %p211 = scmp.ne.s32.totalorder %s203, %s205
      %p212 = scmp.eq.s32.totalorder %s27, 1
      %p213 = por %p211, %p212
      %p214 = scmp.ne.s32.totalorder %s205, %s206
      %p215 = scmp.eq.s32.totalorder %s27, 0
      %p216 = por %p214, %p215
      %p217 = scmp.ne.s32.totalorder %s205, %s206
      %p218 = scmp.eq.s32.totalorder %s28, 1
      %p219 = por %p217, %p218
      %p221 = scmp.ne.s32.totalorder %s206, %s220
      %p222 = scmp.eq.s32.totalorder %s28, 0
      %p223 = por %p221, %p222
      %s225 = sadd.s32 %s224, 1
      %p228 = scmp.eq.s32.totalorder %s22, 1
      %p229 = scmp.ne.s32.totalorder %s224, %s226
      %p230 = scmp.eq.s32.totalorder %s22, 0
      %p231 = por %p229, %p230
      %p232 = scmp.ne.s32.totalorder %s224, %s226
      %p233 = scmp.eq.s32.totalorder %s27, 1
      %p234 = por %p232, %p233
      %p235 = scmp.ne.s32.totalorder %s226, %s227
      %p236 = scmp.eq.s32.totalorder %s27, 0
      %p237 = por %p235, %p236
      %p238 = scmp.ne.s32.totalorder %s226, %s227
      %p239 = scmp.eq.s32.totalorder %s28, 1
      %p240 = por %p238, %p239
      %p242 = scmp.ne.s32.totalorder %s227, %s241
      %p243 = scmp.eq.s32.totalorder %s28, 0
      %p244 = por %p242, %p243
      %s246 = sadd.s32 %s245, 1
      %p249 = scmp.eq.s32.totalorder %s22, 1
      %p250 = scmp.ne.s32.totalorder %s245, %s247
      %p251 = scmp.eq.s32.totalorder %s22, 0
      %p252 = por %p250, %p251
      %p253 = scmp.ne.s32.totalorder %s245, %s247
      %p254 = scmp.eq.s32.totalorder %s27, 1
      %p255 = por %p253, %p254
      %p256 = scmp.ne.s32.totalorder %s247, %s248
      %p257 = scmp.eq.s32.totalorder %s27, 0
      %p258 = por %p256, %p257
      %p259 = scmp.ne.s32.totalorder %s247, %s248
      %p260 = scmp.eq.s32.totalorder %s28, 1
      %p261 = por %p259, %p260
      %p263 = scmp.ne.s32.totalorder %s248, %s262
      %p264 = scmp.eq.s32.totalorder %s28, 0
      %p265 = por %p263, %p264
      %s267 = sadd.s32 %s266, 1
      %p270 = scmp.eq.s32.totalorder %s22, 1
      %p271 = scmp.ne.s32.totalorder %s266, %s268
      %p272 = scmp.eq.s32.totalorder %s22, 0
      %p273 = por %p271, %p272
      %p274 = scmp.ne.s32.totalorder %s266, %s268
      %p275 = scmp.eq.s32.totalorder %s27, 1
      %p276 = por %p274, %p275
      %p277 = scmp.ne.s32.totalorder %s268, %s269
      %p278 = scmp.eq.s32.totalorder %s27, 0
      %p279 = por %p277, %p278
      %p280 = scmp.ne.s32.totalorder %s268, %s269
      %p281 = scmp.eq.s32.totalorder %s28, 1
      %p282 = por %p280, %p281
      %p284 = scmp.ne.s32.totalorder %s269, %s283
      %p285 = scmp.eq.s32.totalorder %s28, 0
      %p286 = por %p284, %p285
      %s288 = sadd.s32 %s287, 1
      %p291 = scmp.eq.s32.totalorder %s22, 1
      %p292 = scmp.ne.s32.totalorder %s287, %s289
      %p293 = scmp.eq.s32.totalorder %s22, 0
      %p294 = por %p292, %p293
      %p295 = scmp.ne.s32.totalorder %s287, %s289
      %p296 = scmp.eq.s32.totalorder %s27, 1
      %p297 = por %p295, %p296
      %p298 = scmp.ne.s32.totalorder %s289, %s290
      %p299 = scmp.eq.s32.totalorder %s27, 0
      %p300 = por %p298, %p299
      %p301 = scmp.ne.s32.totalorder %s289, %s290
      %p302 = scmp.eq.s32.totalorder %s28, 1
      %p303 = por %p301, %p302
      %p305 = scmp.ne.s32.totalorder %s290, %s304
      %p306 = scmp.eq.s32.totalorder %s28, 0
      %p307 = por %p305, %p306
      %s308 = ssub.s32 %s22, %s29
      %p309 = scmp.eq.s32.totalorder %s308, 0
      %s311 = sadd.s32 %s310, 1
      %s312 = scalar_select %p309, %s310, %s311
      %p315 = pneg %p309
      %p316 = scmp.eq.s32.totalorder %s22, 1
      %p317 = por %p315, %p316
      %p318 = scmp.ne.s32.totalorder %s310, %s313
      %p319 = scmp.eq.s32.totalorder %s22, 0
      %p320 = por %p318, %p319
      %p321 = scmp.ne.s32.totalorder %s310, %s313
      %p322 = scmp.eq.s32.totalorder %s27, 1
      %p323 = por %p321, %p322
      %p324 = scmp.ne.s32.totalorder %s313, %s314
      %p325 = scmp.eq.s32.totalorder %s27, 0
      %p326 = por %p324, %p325
      %p327 = scmp.ne.s32.totalorder %s313, %s314
      %p328 = scmp.eq.s32.totalorder %s28, 1
      %p329 = por %p327, %p328
      %p331 = scmp.ne.s32.totalorder %s314, %s330
      %p332 = scmp.eq.s32.totalorder %s28, 0
      %p333 = por %p331, %p332
      %p334 = scmp.le.s32.totalorder 1, %s22
      %p335 = scmp.lt.s32.totalorder %s22, 3
      %p336 = pnand %p334, %p335
      %p337 = pneg %p336
      // Predicated region
      $region9: #{tpu_custom_call.1} parent=5 // pred_check
        _
      $region10: #{tpu_custom_call.1} parent=5 // pred_check_branch
        %339 = sbr.rel (%p336) target = $region12
      $region11: #{tpu_custom_call.1} parent=5 // pred_region
        %s340 = ssub.s32 %s22, 1
        // Predicated region
        $region13: #{tpu_custom_call.1} parent=11 // pred_check
          %p341 = pneg %p69
        $region14: #{tpu_custom_call.1} parent=11 // pred_check_branch
          %343 = sbr.rel (%p341) target = $region16
        $region15: #{tpu_custom_call.1} parent=11 // pred_region
          _
        $region16: #{tpu_custom_call.1} parent=11 // pred_fallthru
          _
        // Predicated region
        $region17: #{tpu_custom_call.1} parent=11 // pred_check
          %p344 = pneg %p90
        $region18: #{tpu_custom_call.1} parent=11 // pred_check_branch
          %346 = sbr.rel (%p344) target = $region20
        $region19: #{tpu_custom_call.1} parent=11 // pred_region
          _
        $region20: #{tpu_custom_call.1} parent=11 // pred_fallthru
          _
        // Predicated region
        $region21: #{tpu_custom_call.1} parent=11 // pred_check
          %p347 = pneg %p111
        $region22: #{tpu_custom_call.1} parent=11 // pred_check_branch
          %349 = sbr.rel (%p347) target = $region24
        $region23: #{tpu_custom_call.1} parent=11 // pred_region
          _
        $region24: #{tpu_custom_call.1} parent=11 // pred_fallthru
          _
        // Predicated region
        $region25: #{tpu_custom_call.1} parent=11 // pred_check
          %p350 = pneg %p132
        $region26: #{tpu_custom_call.1} parent=11 // pred_check_branch
          %352 = sbr.rel (%p350) target = $region28
        $region27: #{tpu_custom_call.1} parent=11 // pred_region
          _
        $region28: #{tpu_custom_call.1} parent=11 // pred_fallthru
          _
        // Predicated region
        $region29: #{tpu_custom_call.1} parent=11 // pred_check
          %p353 = pneg %p153
        $region30: #{tpu_custom_call.1} parent=11 // pred_check_branch
          %355 = sbr.rel (%p353) target = $region32
        $region31: #{tpu_custom_call.1} parent=11 // pred_region
          _
        $region32: #{tpu_custom_call.1} parent=11 // pred_fallthru
          _
        // Predicated region
        $region33: #{tpu_custom_call.1} parent=11 // pred_check
          %p356 = pneg %p174
        $region34: #{tpu_custom_call.1} parent=11 // pred_check_branch
          %358 = sbr.rel (%p356) target = $region36
        $region35: #{tpu_custom_call.1} parent=11 // pred_region
          _
        $region36: #{tpu_custom_call.1} parent=11 // pred_fallthru
          _
        // Predicated region
        $region37: #{tpu_custom_call.1} parent=11 // pred_check
          %p359 = pneg %p195
        $region38: #{tpu_custom_call.1} parent=11 // pred_check_branch
          %361 = sbr.rel (%p359) target = $region40
        $region39: #{tpu_custom_call.1} parent=11 // pred_region
          _
        $region40: #{tpu_custom_call.1} parent=11 // pred_fallthru
          _
        // Predicated region
        $region41: #{tpu_custom_call.1} parent=11 // pred_check
          %p362 = pneg %p216
        $region42: #{tpu_custom_call.1} parent=11 // pred_check_branch
          %364 = sbr.rel (%p362) target = $region44
        $region43: #{tpu_custom_call.1} parent=11 // pred_region
          _
        $region44: #{tpu_custom_call.1} parent=11 // pred_fallthru
          _
        // Predicated region
        $region45: #{tpu_custom_call.1} parent=11 // pred_check
          %p365 = pneg %p237
        $region46: #{tpu_custom_call.1} parent=11 // pred_check_branch
          %367 = sbr.rel (%p365) target = $region48
        $region47: #{tpu_custom_call.1} parent=11 // pred_region
          _
        $region48: #{tpu_custom_call.1} parent=11 // pred_fallthru
          _
        // Predicated region
        $region49: #{tpu_custom_call.1} parent=11 // pred_check
          %p368 = pneg %p258
        $region50: #{tpu_custom_call.1} parent=11 // pred_check_branch
          %370 = sbr.rel (%p368) target = $region52
        $region51: #{tpu_custom_call.1} parent=11 // pred_region
          _
        $region52: #{tpu_custom_call.1} parent=11 // pred_fallthru
          _
        // Predicated region
        $region53: #{tpu_custom_call.1} parent=11 // pred_check
          %p371 = pneg %p279
        $region54: #{tpu_custom_call.1} parent=11 // pred_check_branch
          %373 = sbr.rel (%p371) target = $region56
        $region55: #{tpu_custom_call.1} parent=11 // pred_region
          _
        $region56: #{tpu_custom_call.1} parent=11 // pred_fallthru
          _
        // Predicated region
        $region57: #{tpu_custom_call.1} parent=11 // pred_check
          %p374 = pneg %p300
        $region58: #{tpu_custom_call.1} parent=11 // pred_check_branch
          %376 = sbr.rel (%p374) target = $region60
        $region59: #{tpu_custom_call.1} parent=11 // pred_region
          _
        $region60: #{tpu_custom_call.1} parent=11 // pred_fallthru
          _
      $region12: #{tpu_custom_call.1} parent=5 // pred_fallthru
        _
      %p377 = scmp.lt.s32.totalorder %s22, 2
      // Predicated region
      $region61: #{tpu_custom_call.1} parent=5 // pred_check
        %p378 = pneg %p377
      $region62: #{tpu_custom_call.1} parent=5 // pred_check_branch
        %380 = sbr.rel (%p378) target = $region64
      $region63: #{tpu_custom_call.1} parent=5 // pred_region
        // Predicated region
        $region65: #{tpu_custom_call.1} parent=63 // pred_check
          %p381 = pneg %p42
        $region66: #{tpu_custom_call.1} parent=63 // pred_check_branch
          %383 = sbr.rel (%p381) target = $region68
        $region67: #{tpu_custom_call.1} parent=63 // pred_region
          %p384 = scmp.lt.s32.totalorder %s22, 1
          %s385 = scalar_select %p384, %s22, 1
          %s386 = smul.addr %s385, 8
          %s387 = scalar_lea.vmem %s0, %s386
        $region68: #{tpu_custom_call.1} parent=63 // pred_fallthru
          _
      $region64: #{tpu_custom_call.1} parent=5 // pred_fallthru
        _
      %p388 = scmp.le.s32.totalorder 1, %s22
      %p389 = scmp.lt.s32.totalorder %s22, 3
      %p390 = pnand %p388, %p389
      %p391 = pneg %p390
      // Predicated region
      $region69: #{tpu_custom_call.1} parent=5 // pred_check
        _
      $region70: #{tpu_custom_call.1} parent=5 // pred_check_branch
        %393 = sbr.rel (%p390) target = $region72
      $region71: #{tpu_custom_call.1} parent=5 // pred_region
        %s394 = ssub.s32 %s22, 1
        %p395 = scmp.lt.s32.totalorder %s27, 1
        %s396 = scalar_select %p395, %s27, 1
        %s397 = smul.addr %s396, 8
        %s398 = scalar_lea.vmem %s0, %s397
        %p399 = pneg %p48
        %p400 = pneg %p45
        %p401 = pneg %p69
        %p402 = pneg %p66
        %p403 = pneg %p90
        %p404 = pneg %p87
        %p405 = pneg %p111
        %p406 = pneg %p108
        %p407 = pneg %p132
        %p408 = pneg %p129
        %p409 = pneg %p153
        %p410 = pneg %p150
        %p411 = pneg %p174
        %p412 = pneg %p171
        %p413 = pneg %p195
        %p414 = pneg %p192
        %p415 = pneg %p216
        %p416 = pneg %p213
        %p417 = pneg %p237
        %p418 = pneg %p234
        %p419 = pneg %p258
        %p420 = pneg %p255
        %p421 = pneg %p279
        %p422 = pneg %p276
        %p423 = pneg %p300
        %p424 = pneg %p297
        %p425 = pneg %p326
        %p426 = pneg %p323
        %s427 = sand.u32 %s313, 1
        %s428 = scalar_lea.sflag [#allocation5], %s427
        %s429 = sand.u32 %s313, 1
        %s430 = smul.addr %s429, 8
        %s431 = scalar_lea.vmem [#allocation4], %s430
        %p432 = scmp.lt.s32.totalorder %s27, 1
        %s433 = scalar_select %p432, %s27, 1
        %s434 = smul.addr %s433, 8
        %s435 = scalar_lea.vmem %s0, %s434
        %v437 = vld [vmem:[%s435] sm:$0xff]
        %vm438 = vcmask 261120
        %v439 = vsel %vm438, %v437, 0.0
        %440 = vadd.xlane.f32.xlu0 %v439
        %v441 = vpop.xlane.xlu0 %440
        %v442 = vrcp.pop 32.0
        %v443 = vmul.f32 32.0, %v442
        %v444 = vsub.f32 1.0, %v443
        %v445 = vmul.f32 %v442, %v444
        %v446 = vadd.f32 %v442, %v445
        %vm447 = vweird.f32 %v442
        %v448 = vsel %vm447, %v442, %v446
        %v449 = vmul.f32 %v441, %v448
        %v450 = vsub.f32 %v437, %v449
        %v451 = vmul.f32 %v450, %v450
        %v452 = vsel %vm438, %v451, 0.0
        %453 = vadd.xlane.f32.xlu0 %v452
        %v454 = vpop.xlane.xlu0 %453
        %v455 = vmul.f32 %v454, %v448
        %v456 = vadd.f32 %v455, 1e-05
        %v457 = vrsqrt.pop %v456
        %v458 = vmul.f32 %v457, %v456
        %v459 = vmul.f32 %v458, %v457
        %v460 = vmul.f32 0.5, %v459
        %v461 = vsub.f32 1.5, %v460
        %v462 = vmul.f32 %v457, %v461
        %vm463 = vweird.f32 %v456
        %vm464 = vweird.f32 %v457
        %vm465 = vmor %vm463, %vm464
        %v466 = vsel %vm465, %v457, %v462
        %v467 = vmul.f32 %v450, %v466
        %v468 = vld [vmem:[%s1] sm:$0x1]
        %v470 = vperm.slane %v468, 0
        %v472 = vmul.f32 %v467, %v470
        %v473 = vld [vmem:[%s2] sm:$0x1]
        %v475 = vperm.slane %v473, 0
        %v477 = vadd.f32 %v472, %v475
        %v478 = vpack.c.bf16 %v477, %v477
        %v479 = vld [vmem:[%s3] sm:$0xf]
        %v480 = vld [vmem:[%s3 + $0x4] sm:$0xf]
        %v481 = vld [vmem:[%s3 + $0x8] sm:$0xf]
        %v482 = vld [vmem:[%s3 + $0xc] sm:$0xf]
        %v483 = vld [vmem:[%s4] sm:$0x1]
        %v485 = vperm.slane %v483, 0
        %v491 = vunpack.c.l.b16 %v479
        %v492 = vunpack.c.l.b16 %v480
        %v493 = vunpack.c.l.b16 %v481
        %v494 = vunpack.c.l.b16 %v482
        %v495 = vpack.c.b16 %v492, %v491
        %v496 = vpack.c.b16 %v494, %v493
        %v500 = vsel %vm438, %v478, 0
        %502 = vmatpush.bf16.msra.mxu0 0
        %503 = vmatpush.bf16.msra.mxu0 0
        %504 = vmatpush.bf16.msra.mxu0 0
        %505 = vmatpush.bf16.msra.mxu0 0
        %506 = vmatpush.bf16.msra.mxu0 0
        %507 = vmatpush.bf16.msra.mxu0 0
        %508 = vmatpush.bf16.msra.mxu0 %v496
        %509 = vmatpush.bf16.msra.mxu0 %v495
        %510 = vmatmul.bf16.gmra.mxu0 %v500
        %v511 = vpop.f32.mrf.mxu0
        %v512 = vadd.f32 %v485, %v511
        %v513 = vpop.f32.mrf.mxu0
        %514 = vdwg.mxu0
        %v515 = vpack.c.bf16 %v512, %v512
        %vm516 = vcmask 781312
        %517 = vst.msk [vmem:[#allocation2] sm:$0xf] %vm516, %v515
        %v518 = vlaneseq
        %v519 = vshrl.u32 %v518, 7
        %v520 = vlaneseq
        %v521 = vand.u32 %v520, 127
        %vm522 = vcmp.gt.s32.totalorder %v521, %v519
        %v523 = vld [vmem:[#allocation2] sm:$0xf]
        %v525 = vunpack.c.l.b16 %v523
        %v526 = vpack.c.b16 %v525, %v525
        %527 = vrot.lane.b32.xlu0 %v526, 96
        %v528 = vpop.permute.xlu0 %527
        %vm529 = vcmask 64512
        %v531 = vsel %vm529, %v523, 0
        %v534 = vsel %vm529, %v528, 0
        %536 = vmatpush.bf16.xpose.msra.mxu0 0
        %537 = vmatpush.bf16.xpose.msra.mxu0 0
        %538 = vmatpush.bf16.xpose.msra.mxu0 0
        %539 = vmatpush.bf16.xpose.msra.mxu0 0
        %540 = vmatpush.bf16.xpose.msra.mxu0 0
        %541 = vmatpush.bf16.xpose.msra.mxu0 0
        %542 = vmatpush.bf16.xpose.msra.mxu0 0
        %543 = vmatpush.bf16.xpose.msra.mxu0 %v534
        %544 = vmatmul.bf16.gmra.mxu0 %v531
        %v545 = vpop.f32.mrf.mxu0
        %v546 = vadd.f32 0.0, %v545
        %v547 = vpop.f32.mrf.mxu0
        %548 = vdwg.mxu0
        %v549 = vsel %vm522, -inf, %v546
        %v550 = vsel %vm529, %v549, -inf
        %551 = vmax.xlane.f32.xlu0 %v550
        %v552 = vpop.xlane.xlu0 %551
        %v553 = vsub.f32 %v549, %v552
        %v554 = vmul.f32 %v553, 1.442695
        %v555 = vpow.pop %v554
        %v556 = vsel %vm529, %v555, 0.0
        %557 = vadd.xlane.f32.xlu0 %v556
        %v558 = vpop.xlane.xlu0 %557
        %v559 = vrcp.pop %v558
        %v560 = vmul.f32 %v555, %v559
        %v561 = vpack.c.bf16 %v560, %v560
        %562 = vrot.lane.b32.xlu0 %v526, 64
        %v563 = vpop.permute.xlu0 %562
        %v565 = vsel %vm529, %v561, 0
        %vm567 = vcmask 1043456
        %v569 = vsel %vm567, %v563, 0
        %571 = vmatpush.bf16.msra.mxu0 0
        %572 = vmatpush.bf16.msra.mxu0 0
        %573 = vmatpush.bf16.msra.mxu0 0
        %574 = vmatpush.bf16.msra.mxu0 0
        %575 = vmatpush.bf16.msra.mxu0 0
        %576 = vmatpush.bf16.msra.mxu0 0
        %577 = vmatpush.bf16.msra.mxu0 0
        %578 = vmatpush.bf16.msra.mxu0 %v569
        %579 = vmatmul.bf16.gmra.mxu0 %v565
        %v580 = vpop.f32.mrf.mxu0
        %v581 = vadd.f32 0.0, %v580
        %v582 = vpop.f32.mrf.mxu0
        %583 = vdwg.mxu0
        %584 = vrot.lane.b32.xlu0 %v526, 120
        %v585 = vpop.permute.xlu0 %584
        %586 = vrot.lane.b32.xlu0 %v526, 88
        %v587 = vpop.permute.xlu0 %586
        %v589 = vsel %vm529, %v585, 0
        %v592 = vsel %vm529, %v587, 0
        %594 = vmatpush.bf16.xpose.msra.mxu0 0
        %595 = vmatpush.bf16.xpose.msra.mxu0 0
        %596 = vmatpush.bf16.xpose.msra.mxu0 0
        %597 = vmatpush.bf16.xpose.msra.mxu0 0
        %598 = vmatpush.bf16.xpose.msra.mxu0 0
        %599 = vmatpush.bf16.xpose.msra.mxu0 0
        %600 = vmatpush.bf16.xpose.msra.mxu0 0
        %601 = vmatpush.bf16.xpose.msra.mxu0 %v592
        %602 = vmatmul.bf16.gmra.mxu0 %v589
        %v603 = vpop.f32.mrf.mxu0
        %v604 = vadd.f32 0.0, %v603
        %v605 = vpop.f32.mrf.mxu0
        %606 = vdwg.mxu0
        %v607 = vsel %vm522, -inf, %v604
        %v608 = vsel %vm529, %v607, -inf
        %609 = vmax.xlane.f32.xlu0 %v608
        %v610 = vpop.xlane.xlu0 %609
        %v611 = vsub.f32 %v607, %v610
        %v612 = vmul.f32 %v611, 1.442695
        %v613 = vpow.pop %v612
        %v614 = vsel %vm529, %v613, 0.0
        %615 = vadd.xlane.f32.xlu0 %v614
        %v616 = vpop.xlane.xlu0 %615
        %v617 = vrcp.pop %v616
        %v618 = vmul.f32 %v613, %v617
        %v619 = vpack.c.bf16 %v618, %v618
        %620 = vrot.lane.b32.xlu0 %v526, 56
        %v621 = vpop.permute.xlu0 %620
        %v623 = vsel %vm529, %v619, 0
        %v626 = vsel %vm567, %v621, 0
        %628 = vmatpush.bf16.msra.mxu0 0
        %629 = vmatpush.bf16.msra.mxu0 0
        %630 = vmatpush.bf16.msra.mxu0 0
        %631 = vmatpush.bf16.msra.mxu0 0
        %632 = vmatpush.bf16.msra.mxu0 0
        %633 = vmatpush.bf16.msra.mxu0 0
        %634 = vmatpush.bf16.msra.mxu0 0
        %635 = vmatpush.bf16.msra.mxu0 %v626
        %636 = vmatmul.bf16.gmra.mxu0 %v623
        %v637 = vpop.f32.mrf.mxu0
        %v638 = vadd.f32 0.0, %v637
        %v639 = vpop.f32.mrf.mxu0
        %640 = vdwg.mxu0
        %642 = vrot.lane.b32.xlu0 %v638, 8
        %v643 = vpop.permute.xlu0 %642
        %v645 = vsel %vm529, %v581, %v643
        %v646 = vpack.c.bf16 %v645, %v645
        %vm647 = vcmask 125952
        %648 = vst.msk [vmem:[#allocation3] sm:$0xf] %vm647, %v646
        %v649 = vld [vmem:[#allocation2] sm:$0xf]
        %v651 = vunpack.c.l.b16 %v649
        %v652 = vpack.c.b16 %v651, %v651
        %653 = vrot.lane.b32.xlu0 %v652, 112
        %v654 = vpop.permute.xlu0 %653
        %655 = vrot.lane.b32.xlu0 %v652, 80
        %v656 = vpop.permute.xlu0 %655
        %v658 = vsel %vm529, %v654, 0
        %v661 = vsel %vm529, %v656, 0
        %663 = vmatpush.bf16.xpose.msra.mxu0 0
        %664 = vmatpush.bf16.xpose.msra.mxu0 0
        %665 = vmatpush.bf16.xpose.msra.mxu0 0
        %666 = vmatpush.bf16.xpose.msra.mxu0 0
        %667 = vmatpush.bf16.xpose.msra.mxu0 0
        %668 = vmatpush.bf16.xpose.msra.mxu0 0
        %669 = vmatpush.bf16.xpose.msra.mxu0 0
        %670 = vmatpush.bf16.xpose.msra.mxu0 %v661
        %671 = vmatmul.bf16.gmra.mxu0 %v658
        %v672 = vpop.f32.mrf.mxu0
        %v673 = vadd.f32 0.0, %v672
        %v674 = vpop.f32.mrf.mxu0
        %675 = vdwg.mxu0
        %v676 = vsel %vm522, -inf, %v673
        %v677 = vsel %vm529, %v676, -inf
        %678 = vmax.xlane.f32.xlu0 %v677
        %v679 = vpop.xlane.xlu0 %678
        %v680 = vsub.f32 %v676, %v679
        %v681 = vmul.f32 %v680, 1.442695
        %v682 = vpow.pop %v681
        %v683 = vsel %vm529, %v682, 0.0
        %684 = vadd.xlane.f32.xlu0 %v683
        %v685 = vpop.xlane.xlu0 %684
        %v686 = vrcp.pop %v685
        %v687 = vmul.f32 %v682, %v686
        %v688 = vpack.c.bf16 %v687, %v687
        %689 = vrot.lane.b32.xlu0 %v652, 48
        %v690 = vpop.permute.xlu0 %689
        %v692 = vsel %vm529, %v688, 0
        %v695 = vsel %vm567, %v690, 0
        %697 = vmatpush.bf16.msra.mxu0 0
        %698 = vmatpush.bf16.msra.mxu0 0
        %699 = vmatpush.bf16.msra.mxu0 0
        %700 = vmatpush.bf16.msra.mxu0 0
        %701 = vmatpush.bf16.msra.mxu0 0
        %702 = vmatpush.bf16.msra.mxu0 0
        %703 = vmatpush.bf16.msra.mxu0 0
        %704 = vmatpush.bf16.msra.mxu0 %v695
        %705 = vmatmul.bf16.gmra.mxu0 %v692
        %v706 = vpop.f32.mrf.mxu0
        %v707 = vadd.f32 0.0, %v706
        %v708 = vpop.f32.mrf.mxu0
        %709 = vdwg.mxu0
        %710 = vrot.lane.b32.xlu0 %v652, 104
        %v711 = vpop.permute.xlu0 %710
        %712 = vrot.lane.b32.xlu0 %v652, 72
        %v713 = vpop.permute.xlu0 %712
        %v715 = vsel %vm529, %v711, 0
        %v718 = vsel %vm529, %v713, 0
        %720 = vmatpush.bf16.xpose.msra.mxu0 0
        %721 = vmatpush.bf16.xpose.msra.mxu0 0
        %722 = vmatpush.bf16.xpose.msra.mxu0 0
        %723 = vmatpush.bf16.xpose.msra.mxu0 0
        %724 = vmatpush.bf16.xpose.msra.mxu0 0
        %725 = vmatpush.bf16.xpose.msra.mxu0 0
        %726 = vmatpush.bf16.xpose.msra.mxu0 0
        %727 = vmatpush.bf16.xpose.msra.mxu0 %v718
        %728 = vmatmul.bf16.gmra.mxu0 %v715
        %v729 = vpop.f32.mrf.mxu0
        %v730 = vadd.f32 0.0, %v729
        %v731 = vpop.f32.mrf.mxu0
        %732 = vdwg.mxu0
        %v733 = vsel %vm522, -inf, %v730
        %v734 = vsel %vm529, %v733, -inf
        %735 = vmax.xlane.f32.xlu0 %v734
        %v736 = vpop.xlane.xlu0 %735
        %v737 = vsub.f32 %v733, %v736
        %v738 = vmul.f32 %v737, 1.442695
        %v739 = vpow.pop %v738
        %v740 = vsel %vm529, %v739, 0.0
        %741 = vadd.xlane.f32.xlu0 %v740
        %v742 = vpop.xlane.xlu0 %741
        %v743 = vrcp.pop %v742
        %v744 = vmul.f32 %v739, %v743
        %v745 = vpack.c.bf16 %v744, %v744
        %746 = vrot.lane.b32.xlu0 %v652, 40
        %v747 = vpop.permute.xlu0 %746
        %v749 = vsel %vm529, %v745, 0
        %v752 = vsel %vm567, %v747, 0
        %754 = vmatpush.bf16.msra.mxu0 0
        %755 = vmatpush.bf16.msra.mxu0 0
        %756 = vmatpush.bf16.msra.mxu0 0
        %757 = vmatpush.bf16.msra.mxu0 0
        %758 = vmatpush.bf16.msra.mxu0 0
        %759 = vmatpush.bf16.msra.mxu0 0
        %760 = vmatpush.bf16.msra.mxu0 0
        %761 = vmatpush.bf16.msra.mxu0 %v752
        %762 = vmatmul.bf16.gmra.mxu0 %v749
        %v763 = vpop.f32.mrf.mxu0
        %v764 = vadd.f32 0.0, %v763
        %v765 = vpop.f32.mrf.mxu0
        %766 = vdwg.mxu0
        %768 = vrot.lane.b32.xlu0 %v764, 8
        %v769 = vpop.permute.xlu0 %768
        %v771 = vsel %vm529, %v707, %v769
        %v772 = vpack.c.bf16 %v771, %v771
        %774 = vrot.lane.b32.xlu0 %v772, 16
        %v775 = vpop.permute.xlu0 %774
        %vm777 = vcmask 257152
        %778 = vst.msk [vmem:[#allocation3] sm:$0xf] %vm777, %v775
        %v779 = vld [vmem:[#allocation3] sm:$0xf]
        %v780 = vld [vmem:[%s5] sm:$0xf]
        %v781 = vld [vmem:[%s5 + $0x4] sm:$0xf]
        %v782 = vld [vmem:[%s5 + $0x8] sm:$0xf]
        %v783 = vld [vmem:[%s5 + $0xc] sm:$0xf]
        %v784 = vld [vmem:[%s6] sm:$0x1]
        %v786 = vperm.slane %v784, 0
        %v792 = vunpack.c.l.b16 %v780
        %v793 = vunpack.c.l.b16 %v781
        %v794 = vunpack.c.l.b16 %v782
        %v795 = vunpack.c.l.b16 %v783
        %v796 = vpack.c.b16 %v793, %v792
        %v797 = vpack.c.b16 %v795, %v794
        %v801 = vsel %vm438, %v779, 0
        %803 = vmatpush.bf16.msra.mxu0 0
        %804 = vmatpush.bf16.msra.mxu0 0
        %805 = vmatpush.bf16.msra.mxu0 0
        %806 = vmatpush.bf16.msra.mxu0 0
        %807 = vmatpush.bf16.msra.mxu0 0
        %808 = vmatpush.bf16.msra.mxu0 0
        %809 = vmatpush.bf16.msra.mxu0 %v797
        %810 = vmatpush.bf16.msra.mxu0 %v796
        %811 = vmatmul.bf16.gmra.mxu0 %v801
        %v812 = vpop.f32.mrf.mxu0
        %v813 = vadd.f32 %v786, %v812
        %v814 = vpop.f32.mrf.mxu0
        %815 = vdwg.mxu0
        %v816 = vadd.f32 %v813, %v437
        %v817 = vsel %vm438, %v816, 0.0
        %818 = vadd.xlane.f32.xlu0 %v817
        %v819 = vpop.xlane.xlu0 %818
        %v820 = vmul.f32 %v819, %v448
        %v821 = vsub.f32 %v816, %v820
        %v822 = vmul.f32 %v821, %v821
        %v823 = vsel %vm438, %v822, 0.0
        %824 = vadd.xlane.f32.xlu0 %v823
        %v825 = vpop.xlane.xlu0 %824
        %v826 = vmul.f32 %v825, %v448
        %v827 = vadd.f32 %v826, 1e-05
        %v828 = vrsqrt.pop %v827
        %v829 = vmul.f32 %v828, %v827
        %v830 = vmul.f32 %v829, %v828
        %v831 = vmul.f32 0.5, %v830
        %v832 = vsub.f32 1.5, %v831
        %v833 = vmul.f32 %v828, %v832
        %vm834 = vweird.f32 %v827
        %vm835 = vweird.f32 %v828
        %vm836 = vmor %vm834, %vm835
        %v837 = vsel %vm836, %v828, %v833
        %v838 = vmul.f32 %v821, %v837
        %v839 = vld [vmem:[%s7] sm:$0x1]
        %v841 = vperm.slane %v839, 0
        %v843 = vmul.f32 %v838, %v841
        %v844 = vld [vmem:[%s8] sm:$0x1]
        %v846 = vperm.slane %v844, 0
        %v848 = vadd.f32 %v843, %v846
        %v849 = vpack.c.bf16 %v848, %v848
        %v850 = vld [vmem:[%s9] sm:$0xf]
        %v851 = vld [vmem:[%s9 + $0x4] sm:$0xf]
        %v852 = vld [vmem:[%s9 + $0x8] sm:$0xf]
        %v853 = vld [vmem:[%s9 + $0xc] sm:$0xf]
        %v854 = vld [vmem:[%s10] sm:$0x1]
        %v856 = vperm.slane %v854, 0
        %v862 = vunpack.c.l.b16 %v850
        %v863 = vunpack.c.l.b16 %v851
        %v864 = vunpack.c.l.b16 %v852
        %v865 = vunpack.c.l.b16 %v853
        %v866 = vpack.c.b16 %v863, %v862
        %v867 = vpack.c.b16 %v865, %v864
        %v871 = vsel %vm438, %v849, 0
        %873 = vmatpush.bf16.msra.mxu0 0
        %874 = vmatpush.bf16.msra.mxu0 0
        %875 = vmatpush.bf16.msra.mxu0 0
        %876 = vmatpush.bf16.msra.mxu0 0
        %877 = vmatpush.bf16.msra.mxu0 0
        %878 = vmatpush.bf16.msra.mxu0 0
        %879 = vmatpush.bf16.msra.mxu0 %v867
        %880 = vmatpush.bf16.msra.mxu0 %v866
        %881 = vmatmul.bf16.gmra.mxu0 %v871
        %v882 = vpop.f32.mrf.mxu0
        %v883 = vadd.f32 %v856, %v882
        %v884 = vpop.f32.mrf.mxu0
        %885 = vdwg.mxu0
        %v886 = vmul.f32 %v883, 1.702
        %v887 = vxor.u32 %v886, 2147483648
        %v888 = vmul.f32 %v887, 1.442695
        %v889 = vpow.pop %v888
        %v890 = vadd.f32 %v889, 1.0
        %v891 = vrcp.pop %v890
        %v892 = vmul.f32 %v890, %v891
        %v893 = vsub.f32 1.0, %v892
        %v894 = vmul.f32 %v891, %v893
        %v895 = vadd.f32 %v891, %v894
        %vm896 = vweird.f32 %v890
        %vm897 = vweird.f32 %v891
        %vm898 = vmor %vm896, %vm897
        %v899 = vsel %vm898, %v891, %v895
        %v900 = vand.u32 2147483647, %v890
        %vm901 = vcmp.eq.f32.partialorder %v900, 8.507059e+37
        %v902 = vand.u32 %v890, 2147483648
        %v903 = vor.u32 1.1754944e-38, %v902
        %v904 = vsel %vm901, %v903, %v899
        %v905 = vmul.f32 1.0, %v904
        %v906 = vmul.f32 %v883, %v905
        %v907 = vpack.c.bf16 %v906, %v906
        %v908 = vld [vmem:[%s11] sm:$0xf]
        %v909 = vld [vmem:[%s11 + $0x4] sm:$0xf]
        %v910 = vld [vmem:[%s11 + $0x8] sm:$0xf]
        %v911 = vld [vmem:[%s11 + $0xc] sm:$0xf]
        %v912 = vld [vmem:[%s11 + $0x10] sm:$0xf]
        %v913 = vld [vmem:[%s11 + $0x14] sm:$0xf]
        %v914 = vld [vmem:[%s11 + $0x18] sm:$0xf]
        %v915 = vld [vmem:[%s11 + $0x1c] sm:$0xf]
        %v916 = vld [vmem:[%s11 + $0x20] sm:$0xf]
        %v917 = vld [vmem:[%s11 + $0x24] sm:$0xf]
        %v918 = vld [vmem:[%s11 + $0x28] sm:$0xf]
        %v919 = vld [vmem:[%s11 + $0x2c] sm:$0xf]
        %v920 = vld [vmem:[%s11 + $0x30] sm:$0xf]
        %v921 = vld [vmem:[%s11 + $0x34] sm:$0xf]
        %v922 = vld [vmem:[%s11 + $0x38] sm:$0xf]
        %v923 = vld [vmem:[%s11 + $0x3c] sm:$0xf]
        %v924 = vld [vmem:[%s12] sm:$0x1]
        %v926 = vperm.slane %v924, 0
        %v944 = vunpack.c.l.b16 %v908
        %v945 = vunpack.c.l.b16 %v909
        %v946 = vunpack.c.l.b16 %v910
        %v947 = vunpack.c.l.b16 %v911
        %v948 = vunpack.c.l.b16 %v912
        %v949 = vunpack.c.l.b16 %v913
        %v950 = vunpack.c.l.b16 %v914
        %v951 = vunpack.c.l.b16 %v915
        %v952 = vunpack.c.l.b16 %v916
        %v953 = vunpack.c.l.b16 %v917
        %v954 = vunpack.c.l.b16 %v918
        %v955 = vunpack.c.l.b16 %v919
        %v956 = vunpack.c.l.b16 %v920
        %v957 = vunpack.c.l.b16 %v921
        %v958 = vunpack.c.l.b16 %v922
        %v959 = vunpack.c.l.b16 %v923
        %v960 = vpack.c.b16 %v945, %v944
        %v961 = vpack.c.b16 %v947, %v946
        %v962 = vpack.c.b16 %v949, %v948
        %v963 = vpack.c.b16 %v951, %v950
        %v964 = vpack.c.b16 %v953, %v952
        %v965 = vpack.c.b16 %v955, %v954
        %v966 = vpack.c.b16 %v957, %v956
        %v967 = vpack.c.b16 %v959, %v958
        %976 = vmatpush.bf16.msra.mxu0 %v967
        %977 = vmatpush.bf16.msra.mxu0 %v966
        %978 = vmatpush.bf16.msra.mxu0 %v965
        %979 = vmatpush.bf16.msra.mxu0 %v964
        %980 = vmatpush.bf16.msra.mxu0 %v963
        %981 = vmatpush.bf16.msra.mxu0 %v962
        %982 = vmatpush.bf16.msra.mxu0 %v961
        %983 = vmatpush.bf16.msra.mxu0 %v960
        %984 = vmatmul.bf16.gmra.mxu0 %v907
        %v985 = vpop.f32.mrf.mxu0
        %v986 = vadd.f32 %v926, %v985
        %v987 = vpop.f32.mrf.mxu0
        %988 = vdwg.mxu0
        %v989 = vadd.f32 %v986, %v816
        %990 = vst.msk [vmem:[%s431] sm:$0xff] %vm438, %v989
        %s991 = sand.u32 %s313, 1
        %s992 = scalar_lea.sflag [#allocation5], %s991
        %s993 = sand.u32 %s313, 1
        %s994 = smul.addr %s993, 8
        %s995 = scalar_lea.vmem [#allocation4], %s994
        // Predicated region
        $region73: #{tpu_custom_call.1} parent=71 // pred_check
          %p996 = pneg %p323
        $region74: #{tpu_custom_call.1} parent=71 // pred_check_branch
          %998 = sbr.rel (%p996) target = $region76
        $region75: #{tpu_custom_call.1} parent=71 // pred_region
          %1000 = vsyncadd %s992, 0
          %s1001 = smul.addr %s27, 8
          %s1002 = scalar_lea.hbm %s13, %s1001
          %s1004 = sshll.u32 %s995, 4
          %s1005 = int_to_ptr.vmem [resolvable:$true] %s1004
          %s1006 = sshll.u32 %s1002, 4
          %s1007 = int_to_ptr.hbm [resolvable:$true] %s1006
          %1009 = dma.vmem_to_hbm [thread:$0]  %s1005, 128, %s1007, %s992
        $region76: #{tpu_custom_call.1} parent=71 // pred_fallthru
          _
      $region72: #{tpu_custom_call.1} parent=5 // pred_fallthru
        _
      %p1010 = scmp.le.s32.totalorder 2, %s22
      // Predicated region
      $region77: #{tpu_custom_call.1} parent=5 // pred_check
        %p1011 = pneg %p1010
      $region78: #{tpu_custom_call.1} parent=5 // pred_check_branch
        %1013 = sbr.rel (%p1011) target = $region80
      $region79: #{tpu_custom_call.1} parent=5 // pred_region
        %s1014 = ssub.s32 %s22, 2
        // Predicated region
        $region81: #{tpu_custom_call.1} parent=79 // pred_check
          %p1015 = pneg %p329
        $region82: #{tpu_custom_call.1} parent=79 // pred_check_branch
          %1017 = sbr.rel (%p1015) target = $region84
        $region83: #{tpu_custom_call.1} parent=79 // pred_region
          %s1018 = sand.u32 %s314, 1
          %s1019 = scalar_lea.sflag [#allocation5], %s1018
          %s1020 = sand.u32 %s314, 1
          %s1021 = smul.addr %s1020, 8
          %s1022 = scalar_lea.vmem [#allocation4], %s1021
          %1024 = dma.done %s1019, 128
        $region84: #{tpu_custom_call.1} parent=79 // pred_fallthru
          _
      $region80: #{tpu_custom_call.1} parent=5 // pred_fallthru
        _
    $region6: #{tpu_custom_call.1} parent=1 // loop_footer
      %s26 = sadd.s32 1, %s22
    $region7: #{tpu_custom_call.1} parent=1 // loop_footer_branch
      %21 = sbr.rel target = $region3
    $region8: #{tpu_custom_call.1} parent=1 // loop_exit
      _
    %1025 = vsyncpa [#allocation5], 1
    %s1026 = scalar_lea.sflag [#allocation5], 1
    %1027 = vsyncpa %s1026, 1

</llo_original>
